<compile_context>
chip_gen: v7x
topology: tpu7x:2x2x1
jax: 0.10.0
libtpu: 0.0.40
codegen_flags: <defaults>
</compile_context>

<pallas_src>
import functools

import jax
import jax.numpy as jnp
from jax import lax
from jax.experimental import pallas as pl
from jax.experimental.pallas import tpu as pltpu
import numpy as np

LANE = 128          # lanes per vreg; variable / clause blocks are 128 wide
LANE_SHIFT = 7      # log2(LANE)

# Non-trainable parameters of SatCNFEvaluator (unused by the returned tensors).
FLOOR = jnp.array([1.0], dtype=jnp.float32)
TEMPERATURE = jnp.array([6.0], dtype=jnp.float32)


def _round_up(x, m):
    return ((x + m - 1) // m) * m


def _sat_cnf_kernel(vlo_ref, vhi_ref, flo_ref, fhi_ref,        # SMEM scalar prefetch
                    pred_ref, gvar_ref, ef_ref, gfunt_ref,     # VMEM inputs
                    edge_ref, clause_ref,                      # VMEM outputs
                    acc_ref,                                   # VMEM scratch (FB, 128)
                    *, tile_rows):
    """Per edge tile: bounded pred gather -> threshold -> bounded clause-block OR."""
    i = pl.program_id(0)
    nt = pl.num_programs(0)
    tr = tile_rows
    f32 = jnp.float32
    bf16 = jnp.bfloat16

    @pl.when(i == 0)
    def _init():
        acc_ref[...] = jnp.zeros_like(acc_ref)

    gvar = gvar_ref[...]                         # (TR,128) int32 variable id per edge
    glo = gvar & (LANE - 1)                      # lane within its 128-wide pred block
    ghi = gvar >> LANE_SHIFT                     # pred block id
    ef = ef_ref[...]                             # (TR,128) f32, 0 on padding edges

    # ---- Stage 1: edge_values = edge_feature * pred[gm_var] ----------------------
    # Blockwise hardware lane gather, bounded to the variable blocks this tile touches
    # (scalar-prefetched [vlo, vhi]).
    def gather_block(b, acc):
        blk = jnp.broadcast_to(pred_ref[pl.ds(b, 1), :], (tr, LANE))
        vals = jnp.take_along_axis(blk, glo, axis=1, mode="promise_in_bounds")
        return jnp.where(ghi == b, vals, acc)

    gathered = lax.fori_loop(vlo_ref[i], vhi_ref[i] + 1, gather_block,
                             jnp.zeros((tr, LANE), f32))

    ev = ef * gathered + (1.0 - ef) * 0.5
    # Padding edges have ef == 0 -> ev == 0.5; the STRICT '> 0.5' keeps them at 0.
    bits = (ev > 0.5).astype(f32)                # (TR,128) thresholded edge values
    edge_ref[...] = bits

    # ---- Stage 2: clause_sum[f] += sum of edge bits whose clause id is f ----------
    # Per 128-edge row, loop only over the clause blocks actually present
    # (scalar-prefetched per-row [flo, fhi]); the one-hot mask is at most (128, 128)
    # per visited block.  Accumulation goes into the (FB,128) VMEM scratch at a
    # dynamic SUBLANE offset (clause block id).
    lane_iota = lax.broadcasted_iota(jnp.int32, (1, LANE), 1)
    for r in range(tr):                          # static unroll (LLO-visible)
        gcol = gfunt_ref[:, r:r + 1]             # (128,1) clause ids, edges on sublanes
        brow = bits[r:r + 1, :].astype(bf16)     # (1,128) edge bits, edges on lanes
        row = i * tr + r

        def clause_block(b, carry, gcol=gcol, brow=brow):
            mask = (gcol == b * LANE + lane_iota).astype(bf16)          # (128,128)
            part = jnp.dot(brow, mask, preferred_element_type=f32)      # (1,128)
            acc_ref[pl.ds(b, 1), :] += part
            return carry

        lax.fori_loop(flo_ref[row], fhi_ref[row] + 1, clause_block, 0)

    @pl.when(i == nt - 1)
    def _finalize():
        clause_ref[...] = (acc_ref[...] > 0.0).astype(f32)


@functools.partial(jax.jit, static_argnames=("batch_size",))
def sat_cnf_evaluator(variable_prediction, graph_map, batch_variable_map,
                      batch_function_map, edge_feature, batch_size):
    """JAX/Pallas equivalent of SatCNFEvaluator.forward (node_adj_list=None)."""
    del batch_variable_map  # only its length (variable_num) matters; not needed here
    V = variable_prediction.shape[0]
    E = graph_map.shape[1]
    F = batch_function_map.shape[0]
    B = batch_size

    f32 = jnp.float32
    i32 = jnp.int32

    # Edge tile: TR rows of 128 edges (adaptive so tiny problems do not over-pad).
    TR = max(8, min(32, _round_up(-(-E // LANE), 8)))
    EDGE_TILE = TR * LANE
    Ep = _round_up(E, EDGE_TILE)
    Er = Ep // LANE
    NT = Ep // EDGE_TILE
    Vp = _round_up(V, LANE)
    VB = Vp // LANE
    Fp = _round_up(F, LANE)
    FB = Fp // LANE

    gm_var = graph_map[0].astype(i32)
    gm_fun = graph_map[1].astype(i32)

    # Padding edges: ef = 0 so the strict '> 0.5' threshold keeps them at 0; their
    # variable / clause ids repeat the last real edge so padding never widens the
    # scalar-prefetched block ranges (and never touches out-of-range clause blocks).
    gvar_p = jnp.full((Ep,), gm_var[E - 1], i32).at[:E].set(gm_var)
    gfun_p = jnp.full((Ep,), gm_fun[E - 1], i32).at[:E].set(gm_fun)
    ef_p = jnp.zeros((Ep,), f32).at[:E].set(edge_feature[:, 0].astype(f32))

    gvar2 = gvar_p.reshape(Er, LANE)                     # (Er,128) lane-dense
    ef2 = ef_p.reshape(Er, LANE)                         # (Er,128) lane-dense
    # Clause ids pre-transposed per tile: [i, l, r] = clause of edge (i*TR + r)*128 + l,
    # so the kernel gets an "edges on sublanes" column with a static lane slice.
    gfun_t = gfun_p.reshape(NT, TR, LANE).transpose(0, 2, 1)   # (NT,128,TR)

    pred = (jnp.zeros((Vp,), f32)
            .at[:V].set(variable_prediction[:, 0].astype(f32))
            .reshape(VB, LANE))

    # Scalar-prefetch tables (SMEM): per-tile variable-block range and per-row
    # clause-block range.  They only bound the in-kernel loops; any edge order is
    # still handled correctly (just slower when locality is poor).
    vblk = (gvar_p // LANE).reshape(NT, EDGE_TILE)
    vlo = vblk.min(axis=1).astype(i32)                   # (NT,)
    vhi = vblk.max(axis=1).astype(i32)                   # (NT,)
    fblk = (gfun_p // LANE).reshape(Er, LANE)
    flo = fblk.min(axis=1).astype(i32)                   # (Er,)
    fhi = fblk.max(axis=1).astype(i32)                   # (Er,)

    kernel = functools.partial(_sat_cnf_kernel, tile_rows=TR)

    grid_spec = pltpu.PrefetchScalarGridSpec(
        num_scalar_prefetch=4,
        grid=(NT,),
        in_specs=[
            pl.BlockSpec((VB, LANE), lambda i, *_: (0, 0)),           # pred (resident)
            pl.BlockSpec((TR, LANE), lambda i, *_: (i, 0)),           # gm_var
            pl.BlockSpec((TR, LANE), lambda i, *_: (i, 0)),           # edge_feature
            pl.BlockSpec((None, LANE, TR), lambda i, *_: (i, 0, 0)),  # clause ids (T)
        ],
        out_specs=(
            pl.BlockSpec((TR, LANE), lambda i, *_: (i, 0)),           # edge_values
            pl.BlockSpec((FB, LANE), lambda i, *_: (0, 0)),           # clause_values
        ),
        scratch_shapes=[pltpu.VMEM((FB, LANE), f32)],                 # clause accum
    )

    edge_p, clause_p = pl.pallas_call(
        kernel,
        out_shape=(
            jax.ShapeDtypeStruct((Er, LANE), f32),
            jax.ShapeDtypeStruct((FB, LANE), f32),
        ),
        grid_spec=grid_spec,
        compiler_params=pltpu.CompilerParams(
            # The clause accumulator carries across edge tiles -> reduction axis.
            dimension_semantics=("arbitrary",)),
    )(vlo, vhi, flo, fhi, pred, gvar2, ef2, gfun_t)

    # ---- Stage 3 (hoisted): per-batch reductions over F scalars --------------------
    clause_flat = clause_p.reshape(Fp)[:F]
    bfm = batch_function_map.astype(i32)
    batch_values = jax.ops.segment_sum(clause_flat, bfm, num_segments=B)
    max_sat = jax.ops.segment_sum(jnp.ones((F,), f32), bfm, num_segments=B)

    # Both sides are exact small f32 integers (< 2^24) -> exact equality is safe.
    sat = (max_sat == batch_values).astype(f32)[:, None]
    diff = (max_sat - batch_values)[:, None]
    clause_values = clause_flat[:, None]
    edge_values = edge_p.reshape(Ep)[:E][:, None]

    # Return signature mirrors PyTorch:
    # ((max_sat == batch_values).float(), max_sat - batch_values, graph_map,
    #  clause_values, edge_values)
    return sat, diff, graph_map, clause_values, edge_values


def _reference(variable_prediction, graph_map, batch_function_map, edge_feature, B):
    """Pure-JAX reference of the same forward (for a correctness check)."""
    gm_var = graph_map[0]
    gm_fun = graph_map[1]
    F = batch_function_map.shape[0]
    ev = edge_feature[:, 0] * variable_prediction[gm_var, 0]
    ev = ev + (1.0 - edge_feature[:, 0]) / 2.0
    ev = (ev > 0.5).astype(jnp.float32)
    clause_sum = jax.ops.segment_sum(ev, gm_fun, num_segments=F)
    cv = (clause_sum > 0.0).astype(jnp.float32)
    bv = jax.ops.segment_sum(cv, batch_function_map, num_segments=B)
    ms = jax.ops.segment_sum(jnp.ones((F,), jnp.float32), batch_function_map,
                             num_segments=B)
    return ((ms == bv).astype(jnp.float32)[:, None], (ms - bv)[:, None],
            cv[:, None], ev[:, None])


if __name__ == "__main__":
    key = jax.random.PRNGKey(0)
    k1, k2, k3 = jax.random.split(key, 3)

    # Small synthetic 3-CNF batch: 2 problems, 4 variables / 3 clauses each.
    B = 2            # batch size
    V_PER = 4        # variables per problem
    F_PER = 3        # clauses per problem
    K = 3            # literals per clause
    V = B * V_PER    # total variables = 8
    F = B * F_PER    # total clauses  = 6
    E = F * K        # total edges    = 18

    batch_variable_map = jnp.repeat(jnp.arange(B, dtype=jnp.int32), V_PER)   # (V,)
    batch_function_map = jnp.repeat(jnp.arange(B, dtype=jnp.int32), F_PER)   # (F,)

    # Each clause picks K variables from its own problem; edges ordered by clause.
    var_choice = jax.random.randint(k1, (F, K), 0, V_PER) + \
        batch_function_map[:, None].astype(jnp.int32) * V_PER
    gm_var = var_choice.reshape(-1).astype(jnp.int32)                        # (E,)
    gm_fun = jnp.repeat(jnp.arange(F, dtype=jnp.int32), K)                   # (E,)
    graph_map = jnp.stack([gm_var, gm_fun])                                  # (2, E)

    edge_feature = (jax.random.bernoulli(k2, 0.5, (E, 1)).astype(jnp.float32)
                    * 2.0 - 1.0)                                             # (E, 1)
    variable_prediction = jax.random.uniform(k3, (V, 1), jnp.float32)        # (V, 1)

    sat, diff, gm_out, clause_values, edge_values = jax.block_until_ready(
        sat_cnf_evaluator(variable_prediction, graph_map, batch_variable_map,
                          batch_function_map, edge_feature, batch_size=B))

    # Correctness check against a pure-JAX reference.
    r_sat, r_diff, r_cv, r_ev = _reference(variable_prediction, graph_map,
                                           batch_function_map, edge_feature, B)
    np.testing.assert_allclose(np.asarray(sat), np.asarray(r_sat), atol=0)
    np.testing.assert_allclose(np.asarray(diff), np.asarray(r_diff), atol=0)
    np.testing.assert_allclose(np.asarray(clause_values), np.asarray(r_cv), atol=0)
    np.testing.assert_allclose(np.asarray(edge_values), np.asarray(r_ev), atol=0)

    print("KERNEL_OK")
</pallas_src>

<mosaic_0001>
module attributes {stable_mosaic.version = 11 : i64} {
  func.func @_sat_cnf_kernel(%arg0: i32, %arg1: memref<1xi32, #tpu.memory_space<smem>>, %arg2: memref<1xi32, #tpu.memory_space<smem>>, %arg3: memref<8xi32, #tpu.memory_space<smem>>, %arg4: memref<8xi32, #tpu.memory_space<smem>>, %arg5: memref<1x128xf32, #tpu.memory_space<vmem>>, %arg6: memref<8x128xi32, #tpu.memory_space<vmem>>, %arg7: memref<8x128xf32, #tpu.memory_space<vmem>>, %arg8: memref<1x128x8xi32, #tpu.memory_space<vmem>>, %arg9: memref<8x128xf32, #tpu.memory_space<vmem>>, %arg10: memref<1x128xf32, #tpu.memory_space<vmem>>, %arg11: memref<1x128xf32, #tpu.memory_space<vmem>>) attributes {dimension_semantics = [#tpu.dimension_semantics<arbitrary>], iteration_bounds = array<i64: 1>, scalar_prefetch = 4 : i64, scratch_operands = 1 : i64, tpu.core_type = #tpu.core_type<tc>, window_params = [{pipeline_mode = #tpu.pipeline_mode<synchronous>, transform_indices = @transform_0, window_bounds = array<i64: 1, 128>}, {transform_indices = @transform_1, window_bounds = array<i64: 8, 128>}, {transform_indices = @transform_2, window_bounds = array<i64: 8, 128>}, {transform_indices = @transform_3, window_bounds = array<i64: 1, 128, 8>}, {transform_indices = @transform_4, window_bounds = array<i64: 8, 128>}, {pipeline_mode = #tpu.pipeline_mode<synchronous>, transform_indices = @transform_5, window_bounds = array<i64: 1, 128>}]} {
    %c0_i32 = arith.constant 0 : i32
    %0 = arith.cmpi eq, %arg0, %c0_i32 : i32
    %1 = arith.extui %0 : i1 to i32
    %c0_i32_0 = arith.constant 0 : i32
    %2 = arith.cmpi ne, %1, %c0_i32_0 : i32
    scf.if %2 {
      %cst_63 = arith.constant 0.000000e+00 : f32
      %137 = vector.broadcast %cst_63 : f32 to vector<1x128xf32>
      %c0_64 = arith.constant 0 : index
      %c0_65 = arith.constant 0 : index
      %138 = vector.load %arg11[%c0_64, %c0_65] : memref<1x128xf32, #tpu.memory_space<vmem>>, vector<1x128xf32>
      tpu.vector_store %arg11[%c0_64, %c0_65], %137 {strides = array<i32>} : memref<1x128xf32, #tpu.memory_space<vmem>>, vector<1x128xf32>,
    } else {
    }
    %c0 = arith.constant 0 : index
    %c0_1 = arith.constant 0 : index
    %3 = vector.load %arg6[%c0, %c0_1] : memref<8x128xi32, #tpu.memory_space<vmem>>, vector<8x128xi32>
    %c127_i32 = arith.constant 127 : i32
    %4 = vector.broadcast %c127_i32 : i32 to vector<8x128xi32>
    %5 = arith.andi %3, %4 : vector<8x128xi32>
    %c7_i32 = arith.constant 7 : i32
    %6 = vector.broadcast %c7_i32 : i32 to vector<8x128xi32>
    %7 = arith.shrsi %3, %6 : vector<8x128xi32>
    %c0_2 = arith.constant 0 : index
    %c0_3 = arith.constant 0 : index
    %8 = vector.load %arg7[%c0_2, %c0_3] : memref<8x128xf32, #tpu.memory_space<vmem>>, vector<8x128xf32>
    %9 = arith.index_cast %arg0 : i32 to index
    %10 = memref.load %arg1[%9] : memref<1xi32, #tpu.memory_space<smem>>
    %11 = arith.index_cast %arg0 : i32 to index
    %12 = memref.load %arg2[%11] : memref<1xi32, #tpu.memory_space<smem>>
    %c1_i32 = arith.constant 1 : i32
    %13 = arith.addi %12, %c1_i32 : i32
    %cst = arith.constant 0.000000e+00 : f32
    %14 = vector.broadcast %cst : f32 to vector<8x128xf32>
    %15 = arith.subi %13, %10 : i32
    %16 = arith.addi %10, %15 : i32
    %c1_i32_4 = arith.constant 1 : i32
    %17 = scf.for %arg12 = %10 to %16 step %c1_i32_4 iter_args(%arg13 = %14) -> (vector<8x128xf32>)  : i32 {
      %137 = arith.index_cast %arg12 : i32 to index
      %c0_63 = arith.constant 0 : index
      %138 = vector.load %arg5[%137, %c0_63] : memref<1x128xf32, #tpu.memory_space<vmem>>, vector<1x128xf32>
      %139 = vector.shape_cast %138 : vector<1x128xf32> to vector<1x128xf32>
      %140 = vector.broadcast %139 : vector<1x128xf32> to vector<8x128xf32>
      %141 = vector.shape_cast %5 : vector<8x128xi32> to vector<8x128x1xi32>
      %142 = vector.shape_cast %141 : vector<8x128x1xi32> to vector<8x128xi32>
      %143 = tpu.dynamic_gather %140[%142] in [1] : vector<8x128xf32>, vector<8x128xi32> -> vector<8x128xf32>
      %144 = vector.broadcast %arg12 : i32 to vector<8x128xi32>
      %145 = arith.cmpi eq, %7, %144 : vector<8x128xi32>
      %146 = arith.select %145, %143, %arg13 : vector<8x128xi1>, vector<8x128xf32>
      scf.yield %146 : vector<8x128xf32>
    }
    %18 = arith.mulf %8, %17 : vector<8x128xf32>
    %cst_5 = arith.constant 1.000000e+00 : f32
    %19 = vector.broadcast %cst_5 : f32 to vector<8x128xf32>
    %20 = arith.subf %19, %8 : vector<8x128xf32>
    %cst_6 = arith.constant 5.000000e-01 : f32
    %21 = vector.broadcast %cst_6 : f32 to vector<8x128xf32>
    %22 = arith.mulf %20, %21 : vector<8x128xf32>
    %23 = arith.addf %18, %22 : vector<8x128xf32>
    %cst_7 = arith.constant 5.000000e-01 : f32
    %24 = vector.broadcast %cst_7 : f32 to vector<8x128xf32>
    %25 = arith.cmpf ogt, %23, %24 : vector<8x128xf32>
    %26 = arith.extui %25 : vector<8x128xi1> to vector<8x128xi32>
    %27 = arith.sitofp %26 : vector<8x128xi32> to vector<8x128xf32>
    %c0_8 = arith.constant 0 : index
    %c0_9 = arith.constant 0 : index
    %28 = vector.load %arg9[%c0_8, %c0_9] : memref<8x128xf32, #tpu.memory_space<vmem>>, vector<8x128xf32>
    tpu.vector_store %arg9[%c0_8, %c0_9], %27 {strides = array<i32>} : memref<8x128xf32, #tpu.memory_space<vmem>>, vector<8x128xf32>,
    %29 = tpu.iota {dimensions = array<i32: 1>} : vector<1x128xi32>
    %c0_10 = arith.constant 0 : index
    %c0_11 = arith.constant 0 : index
    %c0_12 = arith.constant 0 : index
    %30 = vector.load %arg8[%c0_10, %c0_11, %c0_12] : memref<1x128x8xi32, #tpu.memory_space<vmem>>, vector<1x128x1xi32>
    %31 = vector.shape_cast %30 : vector<1x128x1xi32> to vector<128x1xi32>
    %32 = vector.extract_strided_slice %27 {offsets = [0, 0], sizes = [1, 128], strides = [1, 1]} : vector<8x128xf32> to vector<1x128xf32>
    %33 = arith.truncf %32 : vector<1x128xf32> to vector<1x128xbf16>
    %c8_i32 = arith.constant 8 : i32
    %34 = arith.muli %arg0, %c8_i32 : i32
    %c0_i32_13 = arith.constant 0 : i32
    %35 = arith.addi %34, %c0_i32_13 : i32
    %36 = arith.index_cast %35 : i32 to index
    %37 = memref.load %arg3[%36] : memref<8xi32, #tpu.memory_space<smem>>
    %38 = arith.index_cast %35 : i32 to index
    %39 = memref.load %arg4[%38] : memref<8xi32, #tpu.memory_space<smem>>
    %c1_i32_14 = arith.constant 1 : i32
    %40 = arith.addi %39, %c1_i32_14 : i32
    %c0_i32_15 = arith.constant 0 : i32
    %41 = arith.subi %40, %37 : i32
    %42 = arith.addi %37, %41 : i32
    %c1_i32_16 = arith.constant 1 : i32
    scf.for %arg12 = %37 to %42 step %c1_i32_16  : i32 {
      %c128_i32 = arith.constant 128 : i32
      %137 = arith.muli %arg12, %c128_i32 : i32
      %138 = vector.broadcast %137 : i32 to vector<1x128xi32>
      %139 = arith.addi %138, %29 : vector<1x128xi32>
      %140 = vector.broadcast %31 : vector<128x1xi32> to vector<128x128xi32>
      %141 = vector.broadcast %139 : vector<1x128xi32> to vector<128x128xi32>
      %142 = arith.cmpi eq, %140, %141 : vector<128x128xi32>
      %143 = arith.extui %142 : vector<128x128xi1> to vector<128x128xi32>
      %144 = arith.sitofp %143 : vector<128x128xi32> to vector<128x128xf32>
      %145 = arith.truncf %144 : vector<128x128xf32> to vector<128x128xbf16>
      %cst_63 = arith.constant dense<0.000000e+00> : vector<1x128xf32>
      %146 = tpu.matmul %33, %145, %cst_63 {dimension_numbers = #tpu.dot_dimension_numbers<[1], [0], [0], [1], [0, 0, 1, 1], [], []>} : vector<1x128xbf16>, vector<128x128xbf16>, vector<1x128xf32> -> vector<1x128xf32>
      %147 = arith.index_cast %arg12 : i32 to index
      %c0_64 = arith.constant 0 : index
      %148 = vector.load %arg11[%147, %c0_64] : memref<1x128xf32, #tpu.memory_space<vmem>>, vector<1x128xf32>
      %149 = arith.addf %148, %146 : vector<1x128xf32>
      %150 = arith.index_cast %arg12 : i32 to index
      %c0_65 = arith.constant 0 : index
      %151 = vector.load %arg11[%150, %c0_65] : memref<1x128xf32, #tpu.memory_space<vmem>>, vector<1x128xf32>
      tpu.vector_store %arg11[%150, %c0_65], %149 {strides = array<i32>} : memref<1x128xf32, #tpu.memory_space<vmem>>, vector<1x128xf32>,
    }
    %c0_17 = arith.constant 0 : index
    %c0_18 = arith.constant 0 : index
    %c1 = arith.constant 1 : index
    %43 = vector.load %arg8[%c0_17, %c0_18, %c1] : memref<1x128x8xi32, #tpu.memory_space<vmem>>, vector<1x128x1xi32>
    %44 = vector.shape_cast %43 : vector<1x128x1xi32> to vector<128x1xi32>
    %45 = vector.extract_strided_slice %27 {offsets = [1, 0], sizes = [1, 128], strides = [1, 1]} : vector<8x128xf32> to vector<1x128xf32>
    %46 = arith.truncf %45 : vector<1x128xf32> to vector<1x128xbf16>
    %c8_i32_19 = arith.constant 8 : i32
    %47 = arith.muli %arg0, %c8_i32_19 : i32
    %c1_i32_20 = arith.constant 1 : i32
    %48 = arith.addi %47, %c1_i32_20 : i32
    %49 = arith.index_cast %48 : i32 to index
    %50 = memref.load %arg3[%49] : memref<8xi32, #tpu.memory_space<smem>>
    %51 = arith.index_cast %48 : i32 to index
    %52 = memref.load %arg4[%51] : memref<8xi32, #tpu.memory_space<smem>>
    %c1_i32_21 = arith.constant 1 : i32
    %53 = arith.addi %52, %c1_i32_21 : i32
    %c0_i32_22 = arith.constant 0 : i32
    %54 = arith.subi %53, %50 : i32
    %55 = arith.addi %50, %54 : i32
    %c1_i32_23 = arith.constant 1 : i32
    scf.for %arg12 = %50 to %55 step %c1_i32_23  : i32 {
      %c128_i32 = arith.constant 128 : i32
      %137 = arith.muli %arg12, %c128_i32 : i32
      %138 = vector.broadcast %137 : i32 to vector<1x128xi32>
      %139 = arith.addi %138, %29 : vector<1x128xi32>
      %140 = vector.broadcast %44 : vector<128x1xi32> to vector<128x128xi32>
      %141 = vector.broadcast %139 : vector<1x128xi32> to vector<128x128xi32>
      %142 = arith.cmpi eq, %140, %141 : vector<128x128xi32>
      %143 = arith.extui %142 : vector<128x128xi1> to vector<128x128xi32>
      %144 = arith.sitofp %143 : vector<128x128xi32> to vector<128x128xf32>
      %145 = arith.truncf %144 : vector<128x128xf32> to vector<128x128xbf16>
      %cst_63 = arith.constant dense<0.000000e+00> : vector<1x128xf32>
      %146 = tpu.matmul %46, %145, %cst_63 {dimension_numbers = #tpu.dot_dimension_numbers<[1], [0], [0], [1], [0, 0, 1, 1], [], []>} : vector<1x128xbf16>, vector<128x128xbf16>, vector<1x128xf32> -> vector<1x128xf32>
      %147 = arith.index_cast %arg12 : i32 to index
      %c0_64 = arith.constant 0 : index
      %148 = vector.load %arg11[%147, %c0_64] : memref<1x128xf32, #tpu.memory_space<vmem>>, vector<1x128xf32>
      %149 = arith.addf %148, %146 : vector<1x128xf32>
      %150 = arith.index_cast %arg12 : i32 to index
      %c0_65 = arith.constant 0 : index
      %151 = vector.load %arg11[%150, %c0_65] : memref<1x128xf32, #tpu.memory_space<vmem>>, vector<1x128xf32>
      tpu.vector_store %arg11[%150, %c0_65], %149 {strides = array<i32>} : memref<1x128xf32, #tpu.memory_space<vmem>>, vector<1x128xf32>,
    }
    %c0_24 = arith.constant 0 : index
    %c0_25 = arith.constant 0 : index
    %c2 = arith.constant 2 : index
    %56 = vector.load %arg8[%c0_24, %c0_25, %c2] : memref<1x128x8xi32, #tpu.memory_space<vmem>>, vector<1x128x1xi32>
    %57 = vector.shape_cast %56 : vector<1x128x1xi32> to vector<128x1xi32>
    %58 = vector.extract_strided_slice %27 {offsets = [2, 0], sizes = [1, 128], strides = [1, 1]} : vector<8x128xf32> to vector<1x128xf32>
    %59 = arith.truncf %58 : vector<1x128xf32> to vector<1x128xbf16>
    %c8_i32_26 = arith.constant 8 : i32
    %60 = arith.muli %arg0, %c8_i32_26 : i32
    %c2_i32 = arith.constant 2 : i32
    %61 = arith.addi %60, %c2_i32 : i32
    %62 = arith.index_cast %61 : i32 to index
    %63 = memref.load %arg3[%62] : memref<8xi32, #tpu.memory_space<smem>>
    %64 = arith.index_cast %61 : i32 to index
    %65 = memref.load %arg4[%64] : memref<8xi32, #tpu.memory_space<smem>>
    %c1_i32_27 = arith.constant 1 : i32
    %66 = arith.addi %65, %c1_i32_27 : i32
    %c0_i32_28 = arith.constant 0 : i32
    %67 = arith.subi %66, %63 : i32
    %68 = arith.addi %63, %67 : i32
    %c1_i32_29 = arith.constant 1 : i32
    scf.for %arg12 = %63 to %68 step %c1_i32_29  : i32 {
      %c128_i32 = arith.constant 128 : i32
      %137 = arith.muli %arg12, %c128_i32 : i32
      %138 = vector.broadcast %137 : i32 to vector<1x128xi32>
      %139 = arith.addi %138, %29 : vector<1x128xi32>
      %140 = vector.broadcast %57 : vector<128x1xi32> to vector<128x128xi32>
      %141 = vector.broadcast %139 : vector<1x128xi32> to vector<128x128xi32>
      %142 = arith.cmpi eq, %140, %141 : vector<128x128xi32>
      %143 = arith.extui %142 : vector<128x128xi1> to vector<128x128xi32>
      %144 = arith.sitofp %143 : vector<128x128xi32> to vector<128x128xf32>
      %145 = arith.truncf %144 : vector<128x128xf32> to vector<128x128xbf16>
      %cst_63 = arith.constant dense<0.000000e+00> : vector<1x128xf32>
      %146 = tpu.matmul %59, %145, %cst_63 {dimension_numbers = #tpu.dot_dimension_numbers<[1], [0], [0], [1], [0, 0, 1, 1], [], []>} : vector<1x128xbf16>, vector<128x128xbf16>, vector<1x128xf32> -> vector<1x128xf32>
      %147 = arith.index_cast %arg12 : i32 to index
      %c0_64 = arith.constant 0 : index
      %148 = vector.load %arg11[%147, %c0_64] : memref<1x128xf32, #tpu.memory_space<vmem>>, vector<1x128xf32>
      %149 = arith.addf %148, %146 : vector<1x128xf32>
      %150 = arith.index_cast %arg12 : i32 to index
      %c0_65 = arith.constant 0 : index
      %151 = vector.load %arg11[%150, %c0_65] : memref<1x128xf32, #tpu.memory_space<vmem>>, vector<1x128xf32>
      tpu.vector_store %arg11[%150, %c0_65], %149 {strides = array<i32>} : memref<1x128xf32, #tpu.memory_space<vmem>>, vector<1x128xf32>,
    }
    %c0_30 = arith.constant 0 : index
    %c0_31 = arith.constant 0 : index
    %c3 = arith.constant 3 : index
    %69 = vector.load %arg8[%c0_30, %c0_31, %c3] : memref<1x128x8xi32, #tpu.memory_space<vmem>>, vector<1x128x1xi32>
    %70 = vector.shape_cast %69 : vector<1x128x1xi32> to vector<128x1xi32>
    %71 = vector.extract_strided_slice %27 {offsets = [3, 0], sizes = [1, 128], strides = [1, 1]} : vector<8x128xf32> to vector<1x128xf32>
    %72 = arith.truncf %71 : vector<1x128xf32> to vector<1x128xbf16>
    %c8_i32_32 = arith.constant 8 : i32
    %73 = arith.muli %arg0, %c8_i32_32 : i32
    %c3_i32 = arith.constant 3 : i32
    %74 = arith.addi %73, %c3_i32 : i32
    %75 = arith.index_cast %74 : i32 to index
    %76 = memref.load %arg3[%75] : memref<8xi32, #tpu.memory_space<smem>>
    %77 = arith.index_cast %74 : i32 to index
    %78 = memref.load %arg4[%77] : memref<8xi32, #tpu.memory_space<smem>>
    %c1_i32_33 = arith.constant 1 : i32
    %79 = arith.addi %78, %c1_i32_33 : i32
    %c0_i32_34 = arith.constant 0 : i32
    %80 = arith.subi %79, %76 : i32
    %81 = arith.addi %76, %80 : i32
    %c1_i32_35 = arith.constant 1 : i32
    scf.for %arg12 = %76 to %81 step %c1_i32_35  : i32 {
      %c128_i32 = arith.constant 128 : i32
      %137 = arith.muli %arg12, %c128_i32 : i32
      %138 = vector.broadcast %137 : i32 to vector<1x128xi32>
      %139 = arith.addi %138, %29 : vector<1x128xi32>
      %140 = vector.broadcast %70 : vector<128x1xi32> to vector<128x128xi32>
      %141 = vector.broadcast %139 : vector<1x128xi32> to vector<128x128xi32>
      %142 = arith.cmpi eq, %140, %141 : vector<128x128xi32>
      %143 = arith.extui %142 : vector<128x128xi1> to vector<128x128xi32>
      %144 = arith.sitofp %143 : vector<128x128xi32> to vector<128x128xf32>
      %145 = arith.truncf %144 : vector<128x128xf32> to vector<128x128xbf16>
      %cst_63 = arith.constant dense<0.000000e+00> : vector<1x128xf32>
      %146 = tpu.matmul %72, %145, %cst_63 {dimension_numbers = #tpu.dot_dimension_numbers<[1], [0], [0], [1], [0, 0, 1, 1], [], []>} : vector<1x128xbf16>, vector<128x128xbf16>, vector<1x128xf32> -> vector<1x128xf32>
      %147 = arith.index_cast %arg12 : i32 to index
      %c0_64 = arith.constant 0 : index
      %148 = vector.load %arg11[%147, %c0_64] : memref<1x128xf32, #tpu.memory_space<vmem>>, vector<1x128xf32>
      %149 = arith.addf %148, %146 : vector<1x128xf32>
      %150 = arith.index_cast %arg12 : i32 to index
      %c0_65 = arith.constant 0 : index
      %151 = vector.load %arg11[%150, %c0_65] : memref<1x128xf32, #tpu.memory_space<vmem>>, vector<1x128xf32>
      tpu.vector_store %arg11[%150, %c0_65], %149 {strides = array<i32>} : memref<1x128xf32, #tpu.memory_space<vmem>>, vector<1x128xf32>,
    }
    %c0_36 = arith.constant 0 : index
    %c0_37 = arith.constant 0 : index
    %c4 = arith.constant 4 : index
    %82 = vector.load %arg8[%c0_36, %c0_37, %c4] : memref<1x128x8xi32, #tpu.memory_space<vmem>>, vector<1x128x1xi32>
    %83 = vector.shape_cast %82 : vector<1x128x1xi32> to vector<128x1xi32>
    %84 = vector.extract_strided_slice %27 {offsets = [4, 0], sizes = [1, 128], strides = [1, 1]} : vector<8x128xf32> to vector<1x128xf32>
    %85 = arith.truncf %84 : vector<1x128xf32> to vector<1x128xbf16>
    %c8_i32_38 = arith.constant 8 : i32
    %86 = arith.muli %arg0, %c8_i32_38 : i32
    %c4_i32 = arith.constant 4 : i32
    %87 = arith.addi %86, %c4_i32 : i32
    %88 = arith.index_cast %87 : i32 to index
    %89 = memref.load %arg3[%88] : memref<8xi32, #tpu.memory_space<smem>>
    %90 = arith.index_cast %87 : i32 to index
    %91 = memref.load %arg4[%90] : memref<8xi32, #tpu.memory_space<smem>>
    %c1_i32_39 = arith.constant 1 : i32
    %92 = arith.addi %91, %c1_i32_39 : i32
    %c0_i32_40 = arith.constant 0 : i32
    %93 = arith.subi %92, %89 : i32
    %94 = arith.addi %89, %93 : i32
    %c1_i32_41 = arith.constant 1 : i32
    scf.for %arg12 = %89 to %94 step %c1_i32_41  : i32 {
      %c128_i32 = arith.constant 128 : i32
      %137 = arith.muli %arg12, %c128_i32 : i32
      %138 = vector.broadcast %137 : i32 to vector<1x128xi32>
      %139 = arith.addi %138, %29 : vector<1x128xi32>
      %140 = vector.broadcast %83 : vector<128x1xi32> to vector<128x128xi32>
      %141 = vector.broadcast %139 : vector<1x128xi32> to vector<128x128xi32>
      %142 = arith.cmpi eq, %140, %141 : vector<128x128xi32>
      %143 = arith.extui %142 : vector<128x128xi1> to vector<128x128xi32>
      %144 = arith.sitofp %143 : vector<128x128xi32> to vector<128x128xf32>
      %145 = arith.truncf %144 : vector<128x128xf32> to vector<128x128xbf16>
      %cst_63 = arith.constant dense<0.000000e+00> : vector<1x128xf32>
      %146 = tpu.matmul %85, %145, %cst_63 {dimension_numbers = #tpu.dot_dimension_numbers<[1], [0], [0], [1], [0, 0, 1, 1], [], []>} : vector<1x128xbf16>, vector<128x128xbf16>, vector<1x128xf32> -> vector<1x128xf32>
      %147 = arith.index_cast %arg12 : i32 to index
      %c0_64 = arith.constant 0 : index
      %148 = vector.load %arg11[%147, %c0_64] : memref<1x128xf32, #tpu.memory_space<vmem>>, vector<1x128xf32>
      %149 = arith.addf %148, %146 : vector<1x128xf32>
      %150 = arith.index_cast %arg12 : i32 to index
      %c0_65 = arith.constant 0 : index
      %151 = vector.load %arg11[%150, %c0_65] : memref<1x128xf32, #tpu.memory_space<vmem>>, vector<1x128xf32>
      tpu.vector_store %arg11[%150, %c0_65], %149 {strides = array<i32>} : memref<1x128xf32, #tpu.memory_space<vmem>>, vector<1x128xf32>,
    }
    %c0_42 = arith.constant 0 : index
    %c0_43 = arith.constant 0 : index
    %c5 = arith.constant 5 : index
    %95 = vector.load %arg8[%c0_42, %c0_43, %c5] : memref<1x128x8xi32, #tpu.memory_space<vmem>>, vector<1x128x1xi32>
    %96 = vector.shape_cast %95 : vector<1x128x1xi32> to vector<128x1xi32>
    %97 = vector.extract_strided_slice %27 {offsets = [5, 0], sizes = [1, 128], strides = [1, 1]} : vector<8x128xf32> to vector<1x128xf32>
    %98 = arith.truncf %97 : vector<1x128xf32> to vector<1x128xbf16>
    %c8_i32_44 = arith.constant 8 : i32
    %99 = arith.muli %arg0, %c8_i32_44 : i32
    %c5_i32 = arith.constant 5 : i32
    %100 = arith.addi %99, %c5_i32 : i32
    %101 = arith.index_cast %100 : i32 to index
    %102 = memref.load %arg3[%101] : memref<8xi32, #tpu.memory_space<smem>>
    %103 = arith.index_cast %100 : i32 to index
    %104 = memref.load %arg4[%103] : memref<8xi32, #tpu.memory_space<smem>>
    %c1_i32_45 = arith.constant 1 : i32
    %105 = arith.addi %104, %c1_i32_45 : i32
    %c0_i32_46 = arith.constant 0 : i32
    %106 = arith.subi %105, %102 : i32
    %107 = arith.addi %102, %106 : i32
    %c1_i32_47 = arith.constant 1 : i32
    scf.for %arg12 = %102 to %107 step %c1_i32_47  : i32 {
      %c128_i32 = arith.constant 128 : i32
      %137 = arith.muli %arg12, %c128_i32 : i32
      %138 = vector.broadcast %137 : i32 to vector<1x128xi32>
      %139 = arith.addi %138, %29 : vector<1x128xi32>
      %140 = vector.broadcast %96 : vector<128x1xi32> to vector<128x128xi32>
      %141 = vector.broadcast %139 : vector<1x128xi32> to vector<128x128xi32>
      %142 = arith.cmpi eq, %140, %141 : vector<128x128xi32>
      %143 = arith.extui %142 : vector<128x128xi1> to vector<128x128xi32>
      %144 = arith.sitofp %143 : vector<128x128xi32> to vector<128x128xf32>
      %145 = arith.truncf %144 : vector<128x128xf32> to vector<128x128xbf16>
      %cst_63 = arith.constant dense<0.000000e+00> : vector<1x128xf32>
      %146 = tpu.matmul %98, %145, %cst_63 {dimension_numbers = #tpu.dot_dimension_numbers<[1], [0], [0], [1], [0, 0, 1, 1], [], []>} : vector<1x128xbf16>, vector<128x128xbf16>, vector<1x128xf32> -> vector<1x128xf32>
      %147 = arith.index_cast %arg12 : i32 to index
      %c0_64 = arith.constant 0 : index
      %148 = vector.load %arg11[%147, %c0_64] : memref<1x128xf32, #tpu.memory_space<vmem>>, vector<1x128xf32>
      %149 = arith.addf %148, %146 : vector<1x128xf32>
      %150 = arith.index_cast %arg12 : i32 to index
      %c0_65 = arith.constant 0 : index
      %151 = vector.load %arg11[%150, %c0_65] : memref<1x128xf32, #tpu.memory_space<vmem>>, vector<1x128xf32>
      tpu.vector_store %arg11[%150, %c0_65], %149 {strides = array<i32>} : memref<1x128xf32, #tpu.memory_space<vmem>>, vector<1x128xf32>,
    }
    %c0_48 = arith.constant 0 : index
    %c0_49 = arith.constant 0 : index
    %c6 = arith.constant 6 : index
    %108 = vector.load %arg8[%c0_48, %c0_49, %c6] : memref<1x128x8xi32, #tpu.memory_space<vmem>>, vector<1x128x1xi32>
    %109 = vector.shape_cast %108 : vector<1x128x1xi32> to vector<128x1xi32>
    %110 = vector.extract_strided_slice %27 {offsets = [6, 0], sizes = [1, 128], strides = [1, 1]} : vector<8x128xf32> to vector<1x128xf32>
    %111 = arith.truncf %110 : vector<1x128xf32> to vector<1x128xbf16>
    %c8_i32_50 = arith.constant 8 : i32
    %112 = arith.muli %arg0, %c8_i32_50 : i32
    %c6_i32 = arith.constant 6 : i32
    %113 = arith.addi %112, %c6_i32 : i32
    %114 = arith.index_cast %113 : i32 to index
    %115 = memref.load %arg3[%114] : memref<8xi32, #tpu.memory_space<smem>>
    %116 = arith.index_cast %113 : i32 to index
    %117 = memref.load %arg4[%116] : memref<8xi32, #tpu.memory_space<smem>>
    %c1_i32_51 = arith.constant 1 : i32
    %118 = arith.addi %117, %c1_i32_51 : i32
    %c0_i32_52 = arith.constant 0 : i32
    %119 = arith.subi %118, %115 : i32
    %120 = arith.addi %115, %119 : i32
    %c1_i32_53 = arith.constant 1 : i32
    scf.for %arg12 = %115 to %120 step %c1_i32_53  : i32 {
      %c128_i32 = arith.constant 128 : i32
      %137 = arith.muli %arg12, %c128_i32 : i32
      %138 = vector.broadcast %137 : i32 to vector<1x128xi32>
      %139 = arith.addi %138, %29 : vector<1x128xi32>
      %140 = vector.broadcast %109 : vector<128x1xi32> to vector<128x128xi32>
      %141 = vector.broadcast %139 : vector<1x128xi32> to vector<128x128xi32>
      %142 = arith.cmpi eq, %140, %141 : vector<128x128xi32>
      %143 = arith.extui %142 : vector<128x128xi1> to vector<128x128xi32>
      %144 = arith.sitofp %143 : vector<128x128xi32> to vector<128x128xf32>
      %145 = arith.truncf %144 : vector<128x128xf32> to vector<128x128xbf16>
      %cst_63 = arith.constant dense<0.000000e+00> : vector<1x128xf32>
      %146 = tpu.matmul %111, %145, %cst_63 {dimension_numbers = #tpu.dot_dimension_numbers<[1], [0], [0], [1], [0, 0, 1, 1], [], []>} : vector<1x128xbf16>, vector<128x128xbf16>, vector<1x128xf32> -> vector<1x128xf32>
      %147 = arith.index_cast %arg12 : i32 to index
      %c0_64 = arith.constant 0 : index
      %148 = vector.load %arg11[%147, %c0_64] : memref<1x128xf32, #tpu.memory_space<vmem>>, vector<1x128xf32>
      %149 = arith.addf %148, %146 : vector<1x128xf32>
      %150 = arith.index_cast %arg12 : i32 to index
      %c0_65 = arith.constant 0 : index
      %151 = vector.load %arg11[%150, %c0_65] : memref<1x128xf32, #tpu.memory_space<vmem>>, vector<1x128xf32>
      tpu.vector_store %arg11[%150, %c0_65], %149 {strides = array<i32>} : memref<1x128xf32, #tpu.memory_space<vmem>>, vector<1x128xf32>,
    }
    %c0_54 = arith.constant 0 : index
    %c0_55 = arith.constant 0 : index
    %c7 = arith.constant 7 : index
    %121 = vector.load %arg8[%c0_54, %c0_55, %c7] : memref<1x128x8xi32, #tpu.memory_space<vmem>>, vector<1x128x1xi32>
    %122 = vector.shape_cast %121 : vector<1x128x1xi32> to vector<128x1xi32>
    %123 = vector.extract_strided_slice %27 {offsets = [7, 0], sizes = [1, 128], strides = [1, 1]} : vector<8x128xf32> to vector<1x128xf32>
    %124 = arith.truncf %123 : vector<1x128xf32> to vector<1x128xbf16>
    %c8_i32_56 = arith.constant 8 : i32
    %125 = arith.muli %arg0, %c8_i32_56 : i32
    %c7_i32_57 = arith.constant 7 : i32
    %126 = arith.addi %125, %c7_i32_57 : i32
    %127 = arith.index_cast %126 : i32 to index
    %128 = memref.load %arg3[%127] : memref<8xi32, #tpu.memory_space<smem>>
    %129 = arith.index_cast %126 : i32 to index
    %130 = memref.load %arg4[%129] : memref<8xi32, #tpu.memory_space<smem>>
    %c1_i32_58 = arith.constant 1 : i32
    %131 = arith.addi %130, %c1_i32_58 : i32
    %c0_i32_59 = arith.constant 0 : i32
    %132 = arith.subi %131, %128 : i32
    %133 = arith.addi %128, %132 : i32
    %c1_i32_60 = arith.constant 1 : i32
    scf.for %arg12 = %128 to %133 step %c1_i32_60  : i32 {
      %c128_i32 = arith.constant 128 : i32
      %137 = arith.muli %arg12, %c128_i32 : i32
      %138 = vector.broadcast %137 : i32 to vector<1x128xi32>
      %139 = arith.addi %138, %29 : vector<1x128xi32>
      %140 = vector.broadcast %122 : vector<128x1xi32> to vector<128x128xi32>
      %141 = vector.broadcast %139 : vector<1x128xi32> to vector<128x128xi32>
      %142 = arith.cmpi eq, %140, %141 : vector<128x128xi32>
      %143 = arith.extui %142 : vector<128x128xi1> to vector<128x128xi32>
      %144 = arith.sitofp %143 : vector<128x128xi32> to vector<128x128xf32>
      %145 = arith.truncf %144 : vector<128x128xf32> to vector<128x128xbf16>
      %cst_63 = arith.constant dense<0.000000e+00> : vector<1x128xf32>
      %146 = tpu.matmul %124, %145, %cst_63 {dimension_numbers = #tpu.dot_dimension_numbers<[1], [0], [0], [1], [0, 0, 1, 1], [], []>} : vector<1x128xbf16>, vector<128x128xbf16>, vector<1x128xf32> -> vector<1x128xf32>
      %147 = arith.index_cast %arg12 : i32 to index
      %c0_64 = arith.constant 0 : index
      %148 = vector.load %arg11[%147, %c0_64] : memref<1x128xf32, #tpu.memory_space<vmem>>, vector<1x128xf32>
      %149 = arith.addf %148, %146 : vector<1x128xf32>
      %150 = arith.index_cast %arg12 : i32 to index
      %c0_65 = arith.constant 0 : index
      %151 = vector.load %arg11[%150, %c0_65] : memref<1x128xf32, #tpu.memory_space<vmem>>, vector<1x128xf32>
      tpu.vector_store %arg11[%150, %c0_65], %149 {strides = array<i32>} : memref<1x128xf32, #tpu.memory_space<vmem>>, vector<1x128xf32>,
    }
    %c0_i32_61 = arith.constant 0 : i32
    %134 = arith.cmpi eq, %arg0, %c0_i32_61 : i32
    %135 = arith.extui %134 : i1 to i32
    %c0_i32_62 = arith.constant 0 : i32
    %136 = arith.cmpi ne, %135, %c0_i32_62 : i32
    scf.if %136 {
      %c0_63 = arith.constant 0 : index
      %c0_64 = arith.constant 0 : index
      %137 = vector.load %arg11[%c0_63, %c0_64] : memref<1x128xf32, #tpu.memory_space<vmem>>, vector<1x128xf32>
      %cst_65 = arith.constant 0.000000e+00 : f32
      %138 = vector.broadcast %cst_65 : f32 to vector<1x128xf32>
      %139 = arith.cmpf ogt, %137, %138 : vector<1x128xf32>
      %140 = arith.extui %139 : vector<1x128xi1> to vector<1x128xi32>
      %141 = arith.sitofp %140 : vector<1x128xi32> to vector<1x128xf32>
      %c0_66 = arith.constant 0 : index
      %c0_67 = arith.constant 0 : index
      %142 = vector.load %arg10[%c0_66, %c0_67] : memref<1x128xf32, #tpu.memory_space<vmem>>, vector<1x128xf32>
      tpu.vector_store %arg10[%c0_66, %c0_67], %141 {strides = array<i32>} : memref<1x128xf32, #tpu.memory_space<vmem>>, vector<1x128xf32>,
    } else {
    }
    return
  }
  func.func @transform_0(%arg0: i32, %arg1: memref<1xi32, #tpu.memory_space<smem>>, %arg2: memref<1xi32, #tpu.memory_space<smem>>, %arg3: memref<8xi32, #tpu.memory_space<smem>>, %arg4: memref<8xi32, #tpu.memory_space<smem>>) -> (i32, i32) {
    %c0_i32 = arith.constant 0 : i32
    %c0_i32_0 = arith.constant 0 : i32
    %c0_i32_1 = arith.constant 0 : i32
    return %c0_i32, %c0_i32_0 : i32, i32
  }
  func.func @transform_1(%arg0: i32, %arg1: memref<1xi32, #tpu.memory_space<smem>>, %arg2: memref<1xi32, #tpu.memory_space<smem>>, %arg3: memref<8xi32, #tpu.memory_space<smem>>, %arg4: memref<8xi32, #tpu.memory_space<smem>>) -> (i32, i32) {
    %c0_i32 = arith.constant 0 : i32
    %c0_i32_0 = arith.constant 0 : i32
    return %arg0, %c0_i32 : i32, i32
  }
  func.func @transform_2(%arg0: i32, %arg1: memref<1xi32, #tpu.memory_space<smem>>, %arg2: memref<1xi32, #tpu.memory_space<smem>>, %arg3: memref<8xi32, #tpu.memory_space<smem>>, %arg4: memref<8xi32, #tpu.memory_space<smem>>) -> (i32, i32) {
    %c0_i32 = arith.constant 0 : i32
    %c0_i32_0 = arith.constant 0 : i32
    return %arg0, %c0_i32 : i32, i32
  }
  func.func @transform_3(%arg0: i32, %arg1: memref<1xi32, #tpu.memory_space<smem>>, %arg2: memref<1xi32, #tpu.memory_space<smem>>, %arg3: memref<8xi32, #tpu.memory_space<smem>>, %arg4: memref<8xi32, #tpu.memory_space<smem>>) -> (i32, i32, i32) {
    %c0_i32 = arith.constant 0 : i32
    %c0_i32_0 = arith.constant 0 : i32
    %c0_i32_1 = arith.constant 0 : i32
    return %arg0, %c0_i32, %c0_i32_0 : i32, i32, i32
  }
  func.func @transform_4(%arg0: i32, %arg1: memref<1xi32, #tpu.memory_space<smem>>, %arg2: memref<1xi32, #tpu.memory_space<smem>>, %arg3: memref<8xi32, #tpu.memory_space<smem>>, %arg4: memref<8xi32, #tpu.memory_space<smem>>) -> (i32, i32) {
    %c0_i32 = arith.constant 0 : i32
    %c0_i32_0 = arith.constant 0 : i32
    return %arg0, %c0_i32 : i32, i32
  }
  func.func @transform_5(%arg0: i32, %arg1: memref<1xi32, #tpu.memory_space<smem>>, %arg2: memref<1xi32, #tpu.memory_space<smem>>, %arg3: memref<8xi32, #tpu.memory_space<smem>>, %arg4: memref<8xi32, #tpu.memory_space<smem>>) -> (i32, i32) {
    %c0_i32 = arith.constant 0 : i32
    %c0_i32_0 = arith.constant 0 : i32
    %c0_i32_1 = arith.constant 0 : i32
    return %c0_i32, %c0_i32_0 : i32, i32
  }
}

</mosaic_0001>

<llo_original>
// kernel: sat_cnf_evaluator.1
$region0: #{sat_cnf_evaluator.1}
  #allocation0 [shape = 'u32[]', space=smem, size = 0x4, offset = 0x4, fixed_abs, tag = 'smem constant byte address 0x4 - core index']
  #allocation1 [shape = 'u32[144,128]{1,0:T(1,128)}', space=vmem, size = 0x12000, scoped, tag = 'internal scratch']
  #allocation2 [shape = 'f32[1,128]{1,0:T(1,128)}', space=vmem, size = 0x200, scoped, tag = 'scratch operand']
  #allocation3 [shape = 's32[1]{0}', space=sflag, size = 0x4, scoped, tag = 'scoped memory for sat_cnf_evaluator.1']
  #allocation4 [shape = 's32[1]{0:T(128)S(6)}', space=smem, size = 0x200, scoped, tag = 'prefetched SMEM operand 0']
  #allocation5 [shape = 's32[1]{0:T(128)S(6)}', space=smem, size = 0x200, scoped, tag = 'prefetched SMEM operand 1']
  #allocation6 [shape = 'u8[512]{0}', space=smem, size = 0x200, scoped, tag = 'prefetched SMEM operand 2']
  #allocation7 [shape = 'u8[512]{0}', space=smem, size = 0x200, scoped, tag = 'prefetched SMEM operand 3']
  %s0 = inlined_call_operand.<no memory space> [shape: s32[1], index: 0, kind: input, shape index: {}]
  %s1 = inlined_call_operand.<no memory space> [shape: s32[1], index: 1, kind: input, shape index: {}]
  %s2 = inlined_call_operand.vmem [shape: s32[8], index: 2, kind: input, shape index: {}]
  %s3 = inlined_call_operand.vmem [shape: s32[8], index: 3, kind: input, shape index: {}]
  %s4 = inlined_call_operand.vmem [shape: f32[1,128], index: 4, kind: input, shape index: {}]
  %s5 = inlined_call_operand.vmem [shape: s32[8,128], index: 5, kind: input, shape index: {}]
  %s6 = inlined_call_operand.vmem [shape: f32[8,128], index: 6, kind: input, shape index: {}]
  %s7 = inlined_call_operand.vmem [shape: s32[1,128,8], index: 7, kind: input, shape index: {}]
  %s8 = inlined_call_operand.vmem [shape: f32[8,128], index: 8, kind: output, shape index: {0}]
  %s9 = inlined_call_operand.vmem [shape: f32[1,128], index: 9, kind: output, shape index: {1}]
  %10 = xla_tuple %s8, %s9
  %s11 = sld [smem:[#allocation0]]
  $region105: #{sat_cnf_evaluator.1} parent=0
    _
  %s13 = ssub.s32 1, %s11
  %s14 = scalar_select 0, %s13, %s11
  %15 = sst [smem:[#allocation4]] %s0
  %16 = sst [smem:[#allocation5]] %s1
  %s17 = sshll.u32 %s2, 4
  %s18 = int_to_ptr.vmem [resolvable:$true] %s17
  %20 = dma.vmem_to_smem %s18, 16, [#allocation6], [#allocation3]
  %s21 = sshll.u32 %s3, 4
  %s22 = int_to_ptr.vmem [resolvable:$true] %s21
  %24 = dma.vmem_to_smem %s22, 16, [#allocation7], [#allocation3]
  %25 = dma.done [#allocation3], 32
  %26 = sfence
  // Predicated region
  $region2: #{sat_cnf_evaluator.1} parent=0 // pred_check
    _
  $region3: #{sat_cnf_evaluator.1} parent=0 // pred_check_branch
    %28 = sbr.rel (0) target = $region5
  $region4: #{sat_cnf_evaluator.1} parent=0 // pred_region
    _
  $region5: #{sat_cnf_evaluator.1} parent=0 // pred_fallthru
    _
  // Predicated region
  $region6: #{sat_cnf_evaluator.1} parent=0 // pred_check
    _
  $region7: #{sat_cnf_evaluator.1} parent=0 // pred_check_branch
    %30 = sbr.rel (0) target = $region9
  $region8: #{sat_cnf_evaluator.1} parent=0 // pred_region
    _
  $region9: #{sat_cnf_evaluator.1} parent=0 // pred_fallthru
    _
  // Predicated region
  $region10: #{sat_cnf_evaluator.1} parent=0 // pred_check
    _
  $region11: #{sat_cnf_evaluator.1} parent=0 // pred_check_branch
    %32 = sbr.rel (0) target = $region13
  $region12: #{sat_cnf_evaluator.1} parent=0 // pred_region
    _
  $region13: #{sat_cnf_evaluator.1} parent=0 // pred_fallthru
    _
  // Predicated region
  $region14: #{sat_cnf_evaluator.1} parent=0 // pred_check
    _
  $region15: #{sat_cnf_evaluator.1} parent=0 // pred_check_branch
    %34 = sbr.rel (0) target = $region17
  $region16: #{sat_cnf_evaluator.1} parent=0 // pred_region
    _
  $region17: #{sat_cnf_evaluator.1} parent=0 // pred_fallthru
    _
  %p36 = scmp.eq.s32.totalorder 0, 0
  // Predicated region
  $region18: #{sat_cnf_evaluator.1} parent=0 // pred_check
    %p37 = pneg %p36
  $region19: #{sat_cnf_evaluator.1} parent=0 // pred_check_branch
    %39 = sbr.rel (%p37) target = $region21
  $region20: #{sat_cnf_evaluator.1} parent=0 // pred_region
    %40 = vst [vmem:[#allocation2] sm:$0x1] 0.0
  $region21: #{sat_cnf_evaluator.1} parent=0 // pred_fallthru
    _
  %v41 = vld [vmem:[%s5] sm:$0xff]
  %v42 = vand.u32 %v41, 127
  %v43 = vshra.s32 %v41, 7
  %v44 = vld [vmem:[%s6] sm:$0xff]
  %s45 = sld [smem:[#allocation4]]
  %s46 = sld [smem:[#allocation5]]
  %s47 = sadd.s32 %s46, 1
  // While loop
  $region22: #{sat_cnf_evaluator.1} parent=0 // loop_pre_header
    _
  $region23: #{sat_cnf_evaluator.1} parent=0 // loop_header
    %s49 = sphi %s45, %s51
    %p50 = scmp.ge.s32.totalorder %s49, %s47
    %v54 = vphi 0.0, %v68
  $region24: #{sat_cnf_evaluator.1} parent=0 // loop_header_branch
    %53 = sbr.rel (%p50) target = $region28
  $region25: #{sat_cnf_evaluator.1} parent=0 // loop_body
    %s55 = scalar_lea.vmem %s4, %s49
    %v56 = vld [vmem:[%s55] sm:$0x1]
    %v58 = vlaneseq
    %v59 = vshrl.u32 %v58, 7
    %v60 = vsub.s32 0, %v59
    %v61 = vrot.slane %v56, %v60
    %63 = vset.pattern.permute.xlu0 %v42
    %64 = vperm.xlu0 %63, %v61
    %v65 = vpop.permute.xlu0 %64
    %v66 = vstv %s49
    %vm67 = vcmp.eq.s32.totalorder %v43, %v66
    %v68 = vsel %vm67, %v65, %v54
  $region26: #{sat_cnf_evaluator.1} parent=0 // loop_footer
    %s51 = sadd.s32 %s49, 1
  $region27: #{sat_cnf_evaluator.1} parent=0 // loop_footer_branch
    %48 = sbr.rel target = $region23
  $region28: #{sat_cnf_evaluator.1} parent=0 // loop_exit
    _
  %v69 = vmul.f32 %v44, %v54
  %v70 = vsub.f32 1.0, %v44
  %v71 = vmul.f32 %v70, 0.5
  %v72 = vadd.f32 %v69, %v71
  %vm73 = vcmp.gt.f32.partialorder %v72, 0.5
  %v74 = vsel %vm73, 1, 0
  %v75 = vcvt.s32.f32 %v74
  %76 = vst [vmem:[%s8] sm:$0xff] %v75
  %v77 = vlaneseq
  %v78 = vand.u32 %v77, 127
  %v79 = vld [vmem:[%s7] sm:$0xff]
  %v80 = vld [vmem:[%s7 + $0x8] sm:$0xff]
  %v81 = vld [vmem:[%s7 + $0x10] sm:$0xff]
  %v82 = vld [vmem:[%s7 + $0x18] sm:$0xff]
  %v83 = vld [vmem:[%s7 + $0x20] sm:$0xff]
  %v84 = vld [vmem:[%s7 + $0x28] sm:$0xff]
  %v85 = vld [vmem:[%s7 + $0x30] sm:$0xff]
  %v86 = vld [vmem:[%s7 + $0x38] sm:$0xff]
  %v87 = vld [vmem:[%s7 + $0x40] sm:$0xff]
  %v88 = vld [vmem:[%s7 + $0x48] sm:$0xff]
  %v89 = vld [vmem:[%s7 + $0x50] sm:$0xff]
  %v90 = vld [vmem:[%s7 + $0x58] sm:$0xff]
  %v91 = vld [vmem:[%s7 + $0x60] sm:$0xff]
  %v92 = vld [vmem:[%s7 + $0x68] sm:$0xff]
  %v93 = vld [vmem:[%s7 + $0x70] sm:$0xff]
  %v94 = vld [vmem:[%s7 + $0x78] sm:$0xff]
  %v95 = vpack.c.bf16 %v75, %v75
  %s96 = smul.u32 0, 8
  %s97 = sld [smem:[#allocation6 + %s96]]
  %s98 = sld [smem:[#allocation7 + %s96]]
  %s99 = sadd.s32 %s98, 1
  // While loop
  $region29: #{sat_cnf_evaluator.1} parent=0 // loop_pre_header
    _
  $region30: #{sat_cnf_evaluator.1} parent=0 // loop_header
    %s101 = sphi %s97, %s103
    %p102 = scmp.ge.s32.totalorder %s101, %s99
  $region31: #{sat_cnf_evaluator.1} parent=0 // loop_header_branch
    %105 = sbr.rel (%p102) target = $region35
  $region32: #{sat_cnf_evaluator.1} parent=0 // loop_body
    %s106 = smul.u32 %s101, 128
    %v107 = vstv %s106
    %v108 = vadd.s32 %v107, %v78
    %109 = vset.pattern.permute.xlu0 0
    %110 = vperm.xlu0 %109, %v79
    %v111 = vpop.permute.xlu0 %110
    %112 = vset.pattern.permute.xlu0 0
    %113 = vperm.xlu0 %112, %v80
    %v114 = vpop.permute.xlu0 %113
    %115 = vset.pattern.permute.xlu0 0
    %116 = vperm.xlu0 %115, %v81
    %v117 = vpop.permute.xlu0 %116
    %118 = vset.pattern.permute.xlu0 0
    %119 = vperm.xlu0 %118, %v82
    %v120 = vpop.permute.xlu0 %119
    %121 = vset.pattern.permute.xlu0 0
    %122 = vperm.xlu0 %121, %v83
    %v123 = vpop.permute.xlu0 %122
    %124 = vset.pattern.permute.xlu0 0
    %125 = vperm.xlu0 %124, %v84
    %v126 = vpop.permute.xlu0 %125
    %127 = vset.pattern.permute.xlu0 0
    %128 = vperm.xlu0 %127, %v85
    %v129 = vpop.permute.xlu0 %128
    %130 = vset.pattern.permute.xlu0 0
    %131 = vperm.xlu0 %130, %v86
    %v132 = vpop.permute.xlu0 %131
    %133 = vset.pattern.permute.xlu0 0
    %134 = vperm.xlu0 %133, %v87
    %v135 = vpop.permute.xlu0 %134
    %136 = vset.pattern.permute.xlu0 0
    %137 = vperm.xlu0 %136, %v88
    %v138 = vpop.permute.xlu0 %137
    %139 = vset.pattern.permute.xlu0 0
    %140 = vperm.xlu0 %139, %v89
    %v141 = vpop.permute.xlu0 %140
    %142 = vset.pattern.permute.xlu0 0
    %143 = vperm.xlu0 %142, %v90
    %v144 = vpop.permute.xlu0 %143
    %145 = vset.pattern.permute.xlu0 0
    %146 = vperm.xlu0 %145, %v91
    %v147 = vpop.permute.xlu0 %146
    %148 = vset.pattern.permute.xlu0 0
    %149 = vperm.xlu0 %148, %v92
    %v150 = vpop.permute.xlu0 %149
    %151 = vset.pattern.permute.xlu0 0
    %152 = vperm.xlu0 %151, %v93
    %v153 = vpop.permute.xlu0 %152
    %154 = vset.pattern.permute.xlu0 0
    %155 = vperm.xlu0 %154, %v94
    %v156 = vpop.permute.xlu0 %155
    %vm157 = vcmp.eq.s32.totalorder %v111, %v108
    %vm158 = vcmp.eq.s32.totalorder %v114, %v108
    %vm159 = vcmp.eq.s32.totalorder %v117, %v108
    %vm160 = vcmp.eq.s32.totalorder %v120, %v108
    %vm161 = vcmp.eq.s32.totalorder %v123, %v108
    %vm162 = vcmp.eq.s32.totalorder %v126, %v108
    %vm163 = vcmp.eq.s32.totalorder %v129, %v108
    %vm164 = vcmp.eq.s32.totalorder %v132, %v108
    %vm165 = vcmp.eq.s32.totalorder %v135, %v108
    %vm166 = vcmp.eq.s32.totalorder %v138, %v108
    %vm167 = vcmp.eq.s32.totalorder %v141, %v108
    %vm168 = vcmp.eq.s32.totalorder %v144, %v108
    %vm169 = vcmp.eq.s32.totalorder %v147, %v108
    %vm170 = vcmp.eq.s32.totalorder %v150, %v108
    %vm171 = vcmp.eq.s32.totalorder %v153, %v108
    %vm172 = vcmp.eq.s32.totalorder %v156, %v108
    %v173 = vsel %vm157, 1, 0
    %v174 = vsel %vm158, 1, 0
    %v175 = vsel %vm159, 1, 0
    %v176 = vsel %vm160, 1, 0
    %v177 = vsel %vm161, 1, 0
    %v178 = vsel %vm162, 1, 0
    %v179 = vsel %vm163, 1, 0
    %v180 = vsel %vm164, 1, 0
    %v181 = vsel %vm165, 1, 0
    %v182 = vsel %vm166, 1, 0
    %v183 = vsel %vm167, 1, 0
    %v184 = vsel %vm168, 1, 0
    %v185 = vsel %vm169, 1, 0
    %v186 = vsel %vm170, 1, 0
    %v187 = vsel %vm171, 1, 0
    %v188 = vsel %vm172, 1, 0
    %v189 = vcvt.s32.f32 %v173
    %v190 = vcvt.s32.f32 %v174
    %v191 = vcvt.s32.f32 %v175
    %v192 = vcvt.s32.f32 %v176
    %v193 = vcvt.s32.f32 %v177
    %v194 = vcvt.s32.f32 %v178
    %v195 = vcvt.s32.f32 %v179
    %v196 = vcvt.s32.f32 %v180
    %v197 = vcvt.s32.f32 %v181
    %v198 = vcvt.s32.f32 %v182
    %v199 = vcvt.s32.f32 %v183
    %v200 = vcvt.s32.f32 %v184
    %v201 = vcvt.s32.f32 %v185
    %v202 = vcvt.s32.f32 %v186
    %v203 = vcvt.s32.f32 %v187
    %v204 = vcvt.s32.f32 %v188
    %v205 = vpack.c.bf16 %v190, %v189
    %v206 = vpack.c.bf16 %v192, %v191
    %v207 = vpack.c.bf16 %v194, %v193
    %v208 = vpack.c.bf16 %v196, %v195
    %v209 = vpack.c.bf16 %v198, %v197
    %v210 = vpack.c.bf16 %v200, %v199
    %v211 = vpack.c.bf16 %v202, %v201
    %v212 = vpack.c.bf16 %v204, %v203
    %213 = vmatprep.subr.bf16.mxu0 0
    %214 = vmatpush1.bf16.msra.mxu0 %v205
    %215 = vmatprep.subr.bf16.mxu0 0
    %216 = vmatpush1.bf16.msra.mxu0 %v206
    %217 = vmatprep.subr.bf16.mxu0 0
    %218 = vmatpush1.bf16.msra.mxu0 %v207
    %219 = vmatprep.subr.bf16.mxu0 0
    %220 = vmatpush1.bf16.msra.mxu0 %v208
    %221 = vmatprep.subr.bf16.mxu0 0
    %222 = vmatpush1.bf16.msra.mxu0 %v209
    %223 = vmatprep.subr.bf16.mxu0 0
    %224 = vmatpush1.bf16.msra.mxu0 %v210
    %225 = vmatprep.subr.bf16.mxu0 0
    %226 = vmatpush1.bf16.msra.mxu0 %v211
    %227 = vmatprep.subr.bf16.mxu0 0
    %228 = vmatpush1.bf16.msra.mxu0 %v212
    %229 = vmatprep.subr.bf16.mxu0 0
    %230 = vmatpush1.bf16.msra.mxu0 0
    %231 = vmatprep.subr.bf16.mxu0 0
    %232 = vmatpush1.bf16.msra.mxu0 0
    %233 = vmatprep.subr.bf16.mxu0 0
    %234 = vmatpush1.bf16.msra.mxu0 0
    %235 = vmatprep.subr.bf16.mxu0 0
    %236 = vmatpush1.bf16.msra.mxu0 0
    %237 = vmatprep.subr.bf16.mxu0 0
    %238 = vmatpush1.bf16.msra.mxu0 0
    %239 = vmatprep.subr.bf16.mxu0 0
    %240 = vmatpush1.bf16.msra.mxu0 0
    %241 = vmatprep.subr.bf16.mxu0 0
    %242 = vmatpush1.bf16.msra.mxu0 0
    %243 = vmatprep.subr.bf16.mxu0 0
    %244 = vmatpush1.bf16.msra.mxu0 0
    %245 = vmatprep.mubr.bf16.mxu0 0
    %246 = vmatmul.mubr.bf16.gmra.mrb[0].mxu0 %v95
    %v247 = vpop.f32.mrb[0].mxu0
    %v248 = vadd.f32 0.0, %v247
    %v249 = vpop.f32.mrb[0].mxu0
    %v250 = vpop.f32.mrb[0].mxu0
    %v251 = vpop.f32.mrb[0].mxu0
    %252 = vdwg.mxu0
    %s253 = scalar_lea.vmem [#allocation2], %s101
    %v254 = vld [vmem:[%s253] sm:$0x1]
    %v255 = vadd.f32 %v254, %v248
    %256 = vst [vmem:[%s253] sm:$0x1] %v255
  $region33: #{sat_cnf_evaluator.1} parent=0 // loop_footer
    %s103 = sadd.s32 %s101, 1
  $region34: #{sat_cnf_evaluator.1} parent=0 // loop_footer_branch
    %100 = sbr.rel target = $region30
  $region35: #{sat_cnf_evaluator.1} parent=0 // loop_exit
    _
  %v257 = vld [vmem:[%s7] sm:$0xff]
  %v258 = vld [vmem:[%s7 + $0x8] sm:$0xff]
  %v259 = vld [vmem:[%s7 + $0x10] sm:$0xff]
  %v260 = vld [vmem:[%s7 + $0x18] sm:$0xff]
  %v261 = vld [vmem:[%s7 + $0x20] sm:$0xff]
  %v262 = vld [vmem:[%s7 + $0x28] sm:$0xff]
  %v263 = vld [vmem:[%s7 + $0x30] sm:$0xff]
  %v264 = vld [vmem:[%s7 + $0x38] sm:$0xff]
  %v265 = vld [vmem:[%s7 + $0x40] sm:$0xff]
  %v266 = vld [vmem:[%s7 + $0x48] sm:$0xff]
  %v267 = vld [vmem:[%s7 + $0x50] sm:$0xff]
  %v268 = vld [vmem:[%s7 + $0x58] sm:$0xff]
  %v269 = vld [vmem:[%s7 + $0x60] sm:$0xff]
  %v270 = vld [vmem:[%s7 + $0x68] sm:$0xff]
  %v271 = vld [vmem:[%s7 + $0x70] sm:$0xff]
  %v272 = vld [vmem:[%s7 + $0x78] sm:$0xff]
  %s273 = sadd.s32 %s96, 1
  %s274 = sld [smem:[#allocation6 + %s273]]
  %s275 = sld [smem:[#allocation7 + %s273]]
  %s276 = sadd.s32 %s275, 1
  // While loop
  $region36: #{sat_cnf_evaluator.1} parent=0 // loop_pre_header
    _
  $region37: #{sat_cnf_evaluator.1} parent=0 // loop_header
    %s278 = sphi %s274, %s280
    %p279 = scmp.ge.s32.totalorder %s278, %s276
  $region38: #{sat_cnf_evaluator.1} parent=0 // loop_header_branch
    %282 = sbr.rel (%p279) target = $region42
  $region39: #{sat_cnf_evaluator.1} parent=0 // loop_body
    %s283 = smul.u32 %s278, 128
    %v284 = vstv %s283
    %v285 = vadd.s32 %v284, %v78
    %286 = vset.pattern.permute.xlu0 1
    %287 = vperm.xlu0 %286, %v257
    %v288 = vpop.permute.xlu0 %287
    %289 = vset.pattern.permute.xlu0 1
    %290 = vperm.xlu0 %289, %v258
    %v291 = vpop.permute.xlu0 %290
    %292 = vset.pattern.permute.xlu0 1
    %293 = vperm.xlu0 %292, %v259
    %v294 = vpop.permute.xlu0 %293
    %295 = vset.pattern.permute.xlu0 1
    %296 = vperm.xlu0 %295, %v260
    %v297 = vpop.permute.xlu0 %296
    %298 = vset.pattern.permute.xlu0 1
    %299 = vperm.xlu0 %298, %v261
    %v300 = vpop.permute.xlu0 %299
    %301 = vset.pattern.permute.xlu0 1
    %302 = vperm.xlu0 %301, %v262
    %v303 = vpop.permute.xlu0 %302
    %304 = vset.pattern.permute.xlu0 1
    %305 = vperm.xlu0 %304, %v263
    %v306 = vpop.permute.xlu0 %305
    %307 = vset.pattern.permute.xlu0 1
    %308 = vperm.xlu0 %307, %v264
    %v309 = vpop.permute.xlu0 %308
    %310 = vset.pattern.permute.xlu0 1
    %311 = vperm.xlu0 %310, %v265
    %v312 = vpop.permute.xlu0 %311
    %313 = vset.pattern.permute.xlu0 1
    %314 = vperm.xlu0 %313, %v266
    %v315 = vpop.permute.xlu0 %314
    %316 = vset.pattern.permute.xlu0 1
    %317 = vperm.xlu0 %316, %v267
    %v318 = vpop.permute.xlu0 %317
    %319 = vset.pattern.permute.xlu0 1
    %320 = vperm.xlu0 %319, %v268
    %v321 = vpop.permute.xlu0 %320
    %322 = vset.pattern.permute.xlu0 1
    %323 = vperm.xlu0 %322, %v269
    %v324 = vpop.permute.xlu0 %323
    %325 = vset.pattern.permute.xlu0 1
    %326 = vperm.xlu0 %325, %v270
    %v327 = vpop.permute.xlu0 %326
    %328 = vset.pattern.permute.xlu0 1
    %329 = vperm.xlu0 %328, %v271
    %v330 = vpop.permute.xlu0 %329
    %331 = vset.pattern.permute.xlu0 1
    %332 = vperm.xlu0 %331, %v272
    %v333 = vpop.permute.xlu0 %332
    %vm334 = vcmp.eq.s32.totalorder %v288, %v285
    %vm335 = vcmp.eq.s32.totalorder %v291, %v285
    %vm336 = vcmp.eq.s32.totalorder %v294, %v285
    %vm337 = vcmp.eq.s32.totalorder %v297, %v285
    %vm338 = vcmp.eq.s32.totalorder %v300, %v285
    %vm339 = vcmp.eq.s32.totalorder %v303, %v285
    %vm340 = vcmp.eq.s32.totalorder %v306, %v285
    %vm341 = vcmp.eq.s32.totalorder %v309, %v285
    %vm342 = vcmp.eq.s32.totalorder %v312, %v285
    %vm343 = vcmp.eq.s32.totalorder %v315, %v285
    %vm344 = vcmp.eq.s32.totalorder %v318, %v285
    %vm345 = vcmp.eq.s32.totalorder %v321, %v285
    %vm346 = vcmp.eq.s32.totalorder %v324, %v285
    %vm347 = vcmp.eq.s32.totalorder %v327, %v285
    %vm348 = vcmp.eq.s32.totalorder %v330, %v285
    %vm349 = vcmp.eq.s32.totalorder %v333, %v285
    %v350 = vsel %vm334, 1, 0
    %v351 = vsel %vm335, 1, 0
    %v352 = vsel %vm336, 1, 0
    %v353 = vsel %vm337, 1, 0
    %v354 = vsel %vm338, 1, 0
    %v355 = vsel %vm339, 1, 0
    %v356 = vsel %vm340, 1, 0
    %v357 = vsel %vm341, 1, 0
    %v358 = vsel %vm342, 1, 0
    %v359 = vsel %vm343, 1, 0
    %v360 = vsel %vm344, 1, 0
    %v361 = vsel %vm345, 1, 0
    %v362 = vsel %vm346, 1, 0
    %v363 = vsel %vm347, 1, 0
    %v364 = vsel %vm348, 1, 0
    %v365 = vsel %vm349, 1, 0
    %v366 = vcvt.s32.f32 %v350
    %v367 = vcvt.s32.f32 %v351
    %v368 = vcvt.s32.f32 %v352
    %v369 = vcvt.s32.f32 %v353
    %v370 = vcvt.s32.f32 %v354
    %v371 = vcvt.s32.f32 %v355
    %v372 = vcvt.s32.f32 %v356
    %v373 = vcvt.s32.f32 %v357
    %v374 = vcvt.s32.f32 %v358
    %v375 = vcvt.s32.f32 %v359
    %v376 = vcvt.s32.f32 %v360
    %v377 = vcvt.s32.f32 %v361
    %v378 = vcvt.s32.f32 %v362
    %v379 = vcvt.s32.f32 %v363
    %v380 = vcvt.s32.f32 %v364
    %v381 = vcvt.s32.f32 %v365
    %v382 = vpack.c.bf16 %v367, %v366
    %v383 = vpack.c.bf16 %v369, %v368
    %v384 = vpack.c.bf16 %v371, %v370
    %v385 = vpack.c.bf16 %v373, %v372
    %v386 = vpack.c.bf16 %v375, %v374
    %v387 = vpack.c.bf16 %v377, %v376
    %v388 = vpack.c.bf16 %v379, %v378
    %v389 = vpack.c.bf16 %v381, %v380
    %v391 = vshrl.u32 %v95, 16
    %394 = vmatprep.subr.bf16.mxu0 0
    %395 = vmatpush1.bf16.msra.mxu0 %v382
    %396 = vmatprep.subr.bf16.mxu0 0
    %397 = vmatpush1.bf16.msra.mxu0 %v383
    %398 = vmatprep.subr.bf16.mxu0 0
    %399 = vmatpush1.bf16.msra.mxu0 %v384
    %400 = vmatprep.subr.bf16.mxu0 0
    %401 = vmatpush1.bf16.msra.mxu0 %v385
    %402 = vmatprep.subr.bf16.mxu0 0
    %403 = vmatpush1.bf16.msra.mxu0 %v386
    %404 = vmatprep.subr.bf16.mxu0 0
    %405 = vmatpush1.bf16.msra.mxu0 %v387
    %406 = vmatprep.subr.bf16.mxu0 0
    %407 = vmatpush1.bf16.msra.mxu0 %v388
    %408 = vmatprep.subr.bf16.mxu0 0
    %409 = vmatpush1.bf16.msra.mxu0 %v389
    %410 = vmatprep.subr.bf16.mxu0 0
    %411 = vmatpush1.bf16.msra.mxu0 0
    %412 = vmatprep.subr.bf16.mxu0 0
    %413 = vmatpush1.bf16.msra.mxu0 0
    %414 = vmatprep.subr.bf16.mxu0 0
    %415 = vmatpush1.bf16.msra.mxu0 0
    %416 = vmatprep.subr.bf16.mxu0 0
    %417 = vmatpush1.bf16.msra.mxu0 0
    %418 = vmatprep.subr.bf16.mxu0 0
    %419 = vmatpush1.bf16.msra.mxu0 0
    %420 = vmatprep.subr.bf16.mxu0 0
    %421 = vmatpush1.bf16.msra.mxu0 0
    %422 = vmatprep.subr.bf16.mxu0 0
    %423 = vmatpush1.bf16.msra.mxu0 0
    %424 = vmatprep.subr.bf16.mxu0 0
    %425 = vmatpush1.bf16.msra.mxu0 0
    %426 = vmatprep.mubr.bf16.mxu0 0
    %427 = vmatmul.mubr.bf16.gmra.mrb[0].mxu0 %v391
    %v428 = vpop.f32.mrb[0].mxu0
    %v429 = vadd.f32 0.0, %v428
    %v430 = vpop.f32.mrb[0].mxu0
    %v431 = vpop.f32.mrb[0].mxu0
    %v432 = vpop.f32.mrb[0].mxu0
    %433 = vdwg.mxu0
    %s434 = scalar_lea.vmem [#allocation2], %s278
    %v435 = vld [vmem:[%s434] sm:$0x1]
    %v436 = vadd.f32 %v435, %v429
    %437 = vst [vmem:[%s434] sm:$0x1] %v436
  $region40: #{sat_cnf_evaluator.1} parent=0 // loop_footer
    %s280 = sadd.s32 %s278, 1
  $region41: #{sat_cnf_evaluator.1} parent=0 // loop_footer_branch
    %277 = sbr.rel target = $region37
  $region42: #{sat_cnf_evaluator.1} parent=0 // loop_exit
    _
  %v438 = vld [vmem:[%s7] sm:$0xff]
  %v439 = vld [vmem:[%s7 + $0x8] sm:$0xff]
  %v440 = vld [vmem:[%s7 + $0x10] sm:$0xff]
  %v441 = vld [vmem:[%s7 + $0x18] sm:$0xff]
  %v442 = vld [vmem:[%s7 + $0x20] sm:$0xff]
  %v443 = vld [vmem:[%s7 + $0x28] sm:$0xff]
  %v444 = vld [vmem:[%s7 + $0x30] sm:$0xff]
  %v445 = vld [vmem:[%s7 + $0x38] sm:$0xff]
  %v446 = vld [vmem:[%s7 + $0x40] sm:$0xff]
  %v447 = vld [vmem:[%s7 + $0x48] sm:$0xff]
  %v448 = vld [vmem:[%s7 + $0x50] sm:$0xff]
  %v449 = vld [vmem:[%s7 + $0x58] sm:$0xff]
  %v450 = vld [vmem:[%s7 + $0x60] sm:$0xff]
  %v451 = vld [vmem:[%s7 + $0x68] sm:$0xff]
  %v452 = vld [vmem:[%s7 + $0x70] sm:$0xff]
  %v453 = vld [vmem:[%s7 + $0x78] sm:$0xff]
  %s454 = sadd.s32 %s96, 2
  %s455 = sld [smem:[#allocation6 + %s454]]
  %s456 = sld [smem:[#allocation7 + %s454]]
  %s457 = sadd.s32 %s456, 1
  // While loop
  $region43: #{sat_cnf_evaluator.1} parent=0 // loop_pre_header
    _
  $region44: #{sat_cnf_evaluator.1} parent=0 // loop_header
    %s459 = sphi %s455, %s461
    %p460 = scmp.ge.s32.totalorder %s459, %s457
  $region45: #{sat_cnf_evaluator.1} parent=0 // loop_header_branch
    %463 = sbr.rel (%p460) target = $region49
  $region46: #{sat_cnf_evaluator.1} parent=0 // loop_body
    %s464 = smul.u32 %s459, 128
    %v465 = vstv %s464
    %v466 = vadd.s32 %v465, %v78
    %467 = vset.pattern.permute.xlu0 2
    %468 = vperm.xlu0 %467, %v438
    %v469 = vpop.permute.xlu0 %468
    %470 = vset.pattern.permute.xlu0 2
    %471 = vperm.xlu0 %470, %v439
    %v472 = vpop.permute.xlu0 %471
    %473 = vset.pattern.permute.xlu0 2
    %474 = vperm.xlu0 %473, %v440
    %v475 = vpop.permute.xlu0 %474
    %476 = vset.pattern.permute.xlu0 2
    %477 = vperm.xlu0 %476, %v441
    %v478 = vpop.permute.xlu0 %477
    %479 = vset.pattern.permute.xlu0 2
    %480 = vperm.xlu0 %479, %v442
    %v481 = vpop.permute.xlu0 %480
    %482 = vset.pattern.permute.xlu0 2
    %483 = vperm.xlu0 %482, %v443
    %v484 = vpop.permute.xlu0 %483
    %485 = vset.pattern.permute.xlu0 2
    %486 = vperm.xlu0 %485, %v444
    %v487 = vpop.permute.xlu0 %486
    %488 = vset.pattern.permute.xlu0 2
    %489 = vperm.xlu0 %488, %v445
    %v490 = vpop.permute.xlu0 %489
    %491 = vset.pattern.permute.xlu0 2
    %492 = vperm.xlu0 %491, %v446
    %v493 = vpop.permute.xlu0 %492
    %494 = vset.pattern.permute.xlu0 2
    %495 = vperm.xlu0 %494, %v447
    %v496 = vpop.permute.xlu0 %495
    %497 = vset.pattern.permute.xlu0 2
    %498 = vperm.xlu0 %497, %v448
    %v499 = vpop.permute.xlu0 %498
    %500 = vset.pattern.permute.xlu0 2
    %501 = vperm.xlu0 %500, %v449
    %v502 = vpop.permute.xlu0 %501
    %503 = vset.pattern.permute.xlu0 2
    %504 = vperm.xlu0 %503, %v450
    %v505 = vpop.permute.xlu0 %504
    %506 = vset.pattern.permute.xlu0 2
    %507 = vperm.xlu0 %506, %v451
    %v508 = vpop.permute.xlu0 %507
    %509 = vset.pattern.permute.xlu0 2
    %510 = vperm.xlu0 %509, %v452
    %v511 = vpop.permute.xlu0 %510
    %512 = vset.pattern.permute.xlu0 2
    %513 = vperm.xlu0 %512, %v453
    %v514 = vpop.permute.xlu0 %513
    %vm515 = vcmp.eq.s32.totalorder %v469, %v466
    %vm516 = vcmp.eq.s32.totalorder %v472, %v466
    %vm517 = vcmp.eq.s32.totalorder %v475, %v466
    %vm518 = vcmp.eq.s32.totalorder %v478, %v466
    %vm519 = vcmp.eq.s32.totalorder %v481, %v466
    %vm520 = vcmp.eq.s32.totalorder %v484, %v466
    %vm521 = vcmp.eq.s32.totalorder %v487, %v466
    %vm522 = vcmp.eq.s32.totalorder %v490, %v466
    %vm523 = vcmp.eq.s32.totalorder %v493, %v466
    %vm524 = vcmp.eq.s32.totalorder %v496, %v466
    %vm525 = vcmp.eq.s32.totalorder %v499, %v466
    %vm526 = vcmp.eq.s32.totalorder %v502, %v466
    %vm527 = vcmp.eq.s32.totalorder %v505, %v466
    %vm528 = vcmp.eq.s32.totalorder %v508, %v466
    %vm529 = vcmp.eq.s32.totalorder %v511, %v466
    %vm530 = vcmp.eq.s32.totalorder %v514, %v466
    %v531 = vsel %vm515, 1, 0
    %v532 = vsel %vm516, 1, 0
    %v533 = vsel %vm517, 1, 0
    %v534 = vsel %vm518, 1, 0
    %v535 = vsel %vm519, 1, 0
    %v536 = vsel %vm520, 1, 0
    %v537 = vsel %vm521, 1, 0
    %v538 = vsel %vm522, 1, 0
    %v539 = vsel %vm523, 1, 0
    %v540 = vsel %vm524, 1, 0
    %v541 = vsel %vm525, 1, 0
    %v542 = vsel %vm526, 1, 0
    %v543 = vsel %vm527, 1, 0
    %v544 = vsel %vm528, 1, 0
    %v545 = vsel %vm529, 1, 0
    %v546 = vsel %vm530, 1, 0
    %v547 = vcvt.s32.f32 %v531
    %v548 = vcvt.s32.f32 %v532
    %v549 = vcvt.s32.f32 %v533
    %v550 = vcvt.s32.f32 %v534
    %v551 = vcvt.s32.f32 %v535
    %v552 = vcvt.s32.f32 %v536
    %v553 = vcvt.s32.f32 %v537
    %v554 = vcvt.s32.f32 %v538
    %v555 = vcvt.s32.f32 %v539
    %v556 = vcvt.s32.f32 %v540
    %v557 = vcvt.s32.f32 %v541
    %v558 = vcvt.s32.f32 %v542
    %v559 = vcvt.s32.f32 %v543
    %v560 = vcvt.s32.f32 %v544
    %v561 = vcvt.s32.f32 %v545
    %v562 = vcvt.s32.f32 %v546
    %v563 = vpack.c.bf16 %v548, %v547
    %v564 = vpack.c.bf16 %v550, %v549
    %v565 = vpack.c.bf16 %v552, %v551
    %v566 = vpack.c.bf16 %v554, %v553
    %v567 = vpack.c.bf16 %v556, %v555
    %v568 = vpack.c.bf16 %v558, %v557
    %v569 = vpack.c.bf16 %v560, %v559
    %v570 = vpack.c.bf16 %v562, %v561
    %v572 = vrot.slane %v95, 1
    %574 = vmatprep.subr.bf16.mxu0 0
    %575 = vmatpush1.bf16.msra.mxu0 %v563
    %576 = vmatprep.subr.bf16.mxu0 0
    %577 = vmatpush1.bf16.msra.mxu0 %v564
    %578 = vmatprep.subr.bf16.mxu0 0
    %579 = vmatpush1.bf16.msra.mxu0 %v565
    %580 = vmatprep.subr.bf16.mxu0 0
    %581 = vmatpush1.bf16.msra.mxu0 %v566
    %582 = vmatprep.subr.bf16.mxu0 0
    %583 = vmatpush1.bf16.msra.mxu0 %v567
    %584 = vmatprep.subr.bf16.mxu0 0
    %585 = vmatpush1.bf16.msra.mxu0 %v568
    %586 = vmatprep.subr.bf16.mxu0 0
    %587 = vmatpush1.bf16.msra.mxu0 %v569
    %588 = vmatprep.subr.bf16.mxu0 0
    %589 = vmatpush1.bf16.msra.mxu0 %v570
    %590 = vmatprep.subr.bf16.mxu0 0
    %591 = vmatpush1.bf16.msra.mxu0 0
    %592 = vmatprep.subr.bf16.mxu0 0
    %593 = vmatpush1.bf16.msra.mxu0 0
    %594 = vmatprep.subr.bf16.mxu0 0
    %595 = vmatpush1.bf16.msra.mxu0 0
    %596 = vmatprep.subr.bf16.mxu0 0
    %597 = vmatpush1.bf16.msra.mxu0 0
    %598 = vmatprep.subr.bf16.mxu0 0
    %599 = vmatpush1.bf16.msra.mxu0 0
    %600 = vmatprep.subr.bf16.mxu0 0
    %601 = vmatpush1.bf16.msra.mxu0 0
    %602 = vmatprep.subr.bf16.mxu0 0
    %603 = vmatpush1.bf16.msra.mxu0 0
    %604 = vmatprep.subr.bf16.mxu0 0
    %605 = vmatpush1.bf16.msra.mxu0 0
    %606 = vmatprep.mubr.bf16.mxu0 0
    %607 = vmatmul.mubr.bf16.gmra.mrb[0].mxu0 %v572
    %v608 = vpop.f32.mrb[0].mxu0
    %v609 = vadd.f32 0.0, %v608
    %v610 = vpop.f32.mrb[0].mxu0
    %v611 = vpop.f32.mrb[0].mxu0
    %v612 = vpop.f32.mrb[0].mxu0
    %613 = vdwg.mxu0
    %s614 = scalar_lea.vmem [#allocation2], %s459
    %v615 = vld [vmem:[%s614] sm:$0x1]
    %v616 = vadd.f32 %v615, %v609
    %617 = vst [vmem:[%s614] sm:$0x1] %v616
  $region47: #{sat_cnf_evaluator.1} parent=0 // loop_footer
    %s461 = sadd.s32 %s459, 1
  $region48: #{sat_cnf_evaluator.1} parent=0 // loop_footer_branch
    %458 = sbr.rel target = $region44
  $region49: #{sat_cnf_evaluator.1} parent=0 // loop_exit
    _
  %v618 = vld [vmem:[%s7] sm:$0xff]
  %v619 = vld [vmem:[%s7 + $0x8] sm:$0xff]
  %v620 = vld [vmem:[%s7 + $0x10] sm:$0xff]
  %v621 = vld [vmem:[%s7 + $0x18] sm:$0xff]
  %v622 = vld [vmem:[%s7 + $0x20] sm:$0xff]
  %v623 = vld [vmem:[%s7 + $0x28] sm:$0xff]
  %v624 = vld [vmem:[%s7 + $0x30] sm:$0xff]
  %v625 = vld [vmem:[%s7 + $0x38] sm:$0xff]
  %v626 = vld [vmem:[%s7 + $0x40] sm:$0xff]
  %v627 = vld [vmem:[%s7 + $0x48] sm:$0xff]
  %v628 = vld [vmem:[%s7 + $0x50] sm:$0xff]
  %v629 = vld [vmem:[%s7 + $0x58] sm:$0xff]
  %v630 = vld [vmem:[%s7 + $0x60] sm:$0xff]
  %v631 = vld [vmem:[%s7 + $0x68] sm:$0xff]
  %v632 = vld [vmem:[%s7 + $0x70] sm:$0xff]
  %v633 = vld [vmem:[%s7 + $0x78] sm:$0xff]
  %s634 = sadd.s32 %s96, 3
  %s635 = sld [smem:[#allocation6 + %s634]]
  %s636 = sld [smem:[#allocation7 + %s634]]
  %s637 = sadd.s32 %s636, 1
  // While loop
  $region50: #{sat_cnf_evaluator.1} parent=0 // loop_pre_header
    _
  $region51: #{sat_cnf_evaluator.1} parent=0 // loop_header
    %s639 = sphi %s635, %s641
    %p640 = scmp.ge.s32.totalorder %s639, %s637
  $region52: #{sat_cnf_evaluator.1} parent=0 // loop_header_branch
    %643 = sbr.rel (%p640) target = $region56
  $region53: #{sat_cnf_evaluator.1} parent=0 // loop_body
    %s644 = smul.u32 %s639, 128
    %v645 = vstv %s644
    %v646 = vadd.s32 %v645, %v78
    %647 = vset.pattern.permute.xlu0 3
    %648 = vperm.xlu0 %647, %v618
    %v649 = vpop.permute.xlu0 %648
    %650 = vset.pattern.permute.xlu0 3
    %651 = vperm.xlu0 %650, %v619
    %v652 = vpop.permute.xlu0 %651
    %653 = vset.pattern.permute.xlu0 3
    %654 = vperm.xlu0 %653, %v620
    %v655 = vpop.permute.xlu0 %654
    %656 = vset.pattern.permute.xlu0 3
    %657 = vperm.xlu0 %656, %v621
    %v658 = vpop.permute.xlu0 %657
    %659 = vset.pattern.permute.xlu0 3
    %660 = vperm.xlu0 %659, %v622
    %v661 = vpop.permute.xlu0 %660
    %662 = vset.pattern.permute.xlu0 3
    %663 = vperm.xlu0 %662, %v623
    %v664 = vpop.permute.xlu0 %663
    %665 = vset.pattern.permute.xlu0 3
    %666 = vperm.xlu0 %665, %v624
    %v667 = vpop.permute.xlu0 %666
    %668 = vset.pattern.permute.xlu0 3
    %669 = vperm.xlu0 %668, %v625
    %v670 = vpop.permute.xlu0 %669
    %671 = vset.pattern.permute.xlu0 3
    %672 = vperm.xlu0 %671, %v626
    %v673 = vpop.permute.xlu0 %672
    %674 = vset.pattern.permute.xlu0 3
    %675 = vperm.xlu0 %674, %v627
    %v676 = vpop.permute.xlu0 %675
    %677 = vset.pattern.permute.xlu0 3
    %678 = vperm.xlu0 %677, %v628
    %v679 = vpop.permute.xlu0 %678
    %680 = vset.pattern.permute.xlu0 3
    %681 = vperm.xlu0 %680, %v629
    %v682 = vpop.permute.xlu0 %681
    %683 = vset.pattern.permute.xlu0 3
    %684 = vperm.xlu0 %683, %v630
    %v685 = vpop.permute.xlu0 %684
    %686 = vset.pattern.permute.xlu0 3
    %687 = vperm.xlu0 %686, %v631
    %v688 = vpop.permute.xlu0 %687
    %689 = vset.pattern.permute.xlu0 3
    %690 = vperm.xlu0 %689, %v632
    %v691 = vpop.permute.xlu0 %690
    %692 = vset.pattern.permute.xlu0 3
    %693 = vperm.xlu0 %692, %v633
    %v694 = vpop.permute.xlu0 %693
    %vm695 = vcmp.eq.s32.totalorder %v649, %v646
    %vm696 = vcmp.eq.s32.totalorder %v652, %v646
    %vm697 = vcmp.eq.s32.totalorder %v655, %v646
    %vm698 = vcmp.eq.s32.totalorder %v658, %v646
    %vm699 = vcmp.eq.s32.totalorder %v661, %v646
    %vm700 = vcmp.eq.s32.totalorder %v664, %v646
    %vm701 = vcmp.eq.s32.totalorder %v667, %v646
    %vm702 = vcmp.eq.s32.totalorder %v670, %v646
    %vm703 = vcmp.eq.s32.totalorder %v673, %v646
    %vm704 = vcmp.eq.s32.totalorder %v676, %v646
    %vm705 = vcmp.eq.s32.totalorder %v679, %v646
    %vm706 = vcmp.eq.s32.totalorder %v682, %v646
    %vm707 = vcmp.eq.s32.totalorder %v685, %v646
    %vm708 = vcmp.eq.s32.totalorder %v688, %v646
    %vm709 = vcmp.eq.s32.totalorder %v691, %v646
    %vm710 = vcmp.eq.s32.totalorder %v694, %v646
    %v711 = vsel %vm695, 1, 0
    %v712 = vsel %vm696, 1, 0
    %v713 = vsel %vm697, 1, 0
    %v714 = vsel %vm698, 1, 0
    %v715 = vsel %vm699, 1, 0
    %v716 = vsel %vm700, 1, 0
    %v717 = vsel %vm701, 1, 0
    %v718 = vsel %vm702, 1, 0
    %v719 = vsel %vm703, 1, 0
    %v720 = vsel %vm704, 1, 0
    %v721 = vsel %vm705, 1, 0
    %v722 = vsel %vm706, 1, 0
    %v723 = vsel %vm707, 1, 0
    %v724 = vsel %vm708, 1, 0
    %v725 = vsel %vm709, 1, 0
    %v726 = vsel %vm710, 1, 0
    %v727 = vcvt.s32.f32 %v711
    %v728 = vcvt.s32.f32 %v712
    %v729 = vcvt.s32.f32 %v713
    %v730 = vcvt.s32.f32 %v714
    %v731 = vcvt.s32.f32 %v715
    %v732 = vcvt.s32.f32 %v716
    %v733 = vcvt.s32.f32 %v717
    %v734 = vcvt.s32.f32 %v718
    %v735 = vcvt.s32.f32 %v719
    %v736 = vcvt.s32.f32 %v720
    %v737 = vcvt.s32.f32 %v721
    %v738 = vcvt.s32.f32 %v722
    %v739 = vcvt.s32.f32 %v723
    %v740 = vcvt.s32.f32 %v724
    %v741 = vcvt.s32.f32 %v725
    %v742 = vcvt.s32.f32 %v726
    %v743 = vpack.c.bf16 %v728, %v727
    %v744 = vpack.c.bf16 %v730, %v729
    %v745 = vpack.c.bf16 %v732, %v731
    %v746 = vpack.c.bf16 %v734, %v733
    %v747 = vpack.c.bf16 %v736, %v735
    %v748 = vpack.c.bf16 %v738, %v737
    %v749 = vpack.c.bf16 %v740, %v739
    %v750 = vpack.c.bf16 %v742, %v741
    %v752 = vshrl.u32 %v95, 16
    %v754 = vrot.slane %v752, 1
    %756 = vmatprep.subr.bf16.mxu0 0
    %757 = vmatpush1.bf16.msra.mxu0 %v743
    %758 = vmatprep.subr.bf16.mxu0 0
    %759 = vmatpush1.bf16.msra.mxu0 %v744
    %760 = vmatprep.subr.bf16.mxu0 0
    %761 = vmatpush1.bf16.msra.mxu0 %v745
    %762 = vmatprep.subr.bf16.mxu0 0
    %763 = vmatpush1.bf16.msra.mxu0 %v746
    %764 = vmatprep.subr.bf16.mxu0 0
    %765 = vmatpush1.bf16.msra.mxu0 %v747
    %766 = vmatprep.subr.bf16.mxu0 0
    %767 = vmatpush1.bf16.msra.mxu0 %v748
    %768 = vmatprep.subr.bf16.mxu0 0
    %769 = vmatpush1.bf16.msra.mxu0 %v749
    %770 = vmatprep.subr.bf16.mxu0 0
    %771 = vmatpush1.bf16.msra.mxu0 %v750
    %772 = vmatprep.subr.bf16.mxu0 0
    %773 = vmatpush1.bf16.msra.mxu0 0
    %774 = vmatprep.subr.bf16.mxu0 0
    %775 = vmatpush1.bf16.msra.mxu0 0
    %776 = vmatprep.subr.bf16.mxu0 0
    %777 = vmatpush1.bf16.msra.mxu0 0
    %778 = vmatprep.subr.bf16.mxu0 0
    %779 = vmatpush1.bf16.msra.mxu0 0
    %780 = vmatprep.subr.bf16.mxu0 0
    %781 = vmatpush1.bf16.msra.mxu0 0
    %782 = vmatprep.subr.bf16.mxu0 0
    %783 = vmatpush1.bf16.msra.mxu0 0
    %784 = vmatprep.subr.bf16.mxu0 0
    %785 = vmatpush1.bf16.msra.mxu0 0
    %786 = vmatprep.subr.bf16.mxu0 0
    %787 = vmatpush1.bf16.msra.mxu0 0
    %788 = vmatprep.mubr.bf16.mxu0 0
    %789 = vmatmul.mubr.bf16.gmra.mrb[0].mxu0 %v754
    %v790 = vpop.f32.mrb[0].mxu0
    %v791 = vadd.f32 0.0, %v790
    %v792 = vpop.f32.mrb[0].mxu0
    %v793 = vpop.f32.mrb[0].mxu0
    %v794 = vpop.f32.mrb[0].mxu0
    %795 = vdwg.mxu0
    %s796 = scalar_lea.vmem [#allocation2], %s639
    %v797 = vld [vmem:[%s796] sm:$0x1]
    %v798 = vadd.f32 %v797, %v791
    %799 = vst [vmem:[%s796] sm:$0x1] %v798
  $region54: #{sat_cnf_evaluator.1} parent=0 // loop_footer
    %s641 = sadd.s32 %s639, 1
  $region55: #{sat_cnf_evaluator.1} parent=0 // loop_footer_branch
    %638 = sbr.rel target = $region51
  $region56: #{sat_cnf_evaluator.1} parent=0 // loop_exit
    _
  %v800 = vld [vmem:[%s7] sm:$0xff]
  %v801 = vld [vmem:[%s7 + $0x8] sm:$0xff]
  %v802 = vld [vmem:[%s7 + $0x10] sm:$0xff]
  %v803 = vld [vmem:[%s7 + $0x18] sm:$0xff]
  %v804 = vld [vmem:[%s7 + $0x20] sm:$0xff]
  %v805 = vld [vmem:[%s7 + $0x28] sm:$0xff]
  %v806 = vld [vmem:[%s7 + $0x30] sm:$0xff]
  %v807 = vld [vmem:[%s7 + $0x38] sm:$0xff]
  %v808 = vld [vmem:[%s7 + $0x40] sm:$0xff]
  %v809 = vld [vmem:[%s7 + $0x48] sm:$0xff]
  %v810 = vld [vmem:[%s7 + $0x50] sm:$0xff]
  %v811 = vld [vmem:[%s7 + $0x58] sm:$0xff]
  %v812 = vld [vmem:[%s7 + $0x60] sm:$0xff]
  %v813 = vld [vmem:[%s7 + $0x68] sm:$0xff]
  %v814 = vld [vmem:[%s7 + $0x70] sm:$0xff]
  %v815 = vld [vmem:[%s7 + $0x78] sm:$0xff]
  %s816 = sadd.s32 %s96, 4
  %s817 = sld [smem:[#allocation6 + %s816]]
  %s818 = sld [smem:[#allocation7 + %s816]]
  %s819 = sadd.s32 %s818, 1
  // While loop
  $region57: #{sat_cnf_evaluator.1} parent=0 // loop_pre_header
    _
  $region58: #{sat_cnf_evaluator.1} parent=0 // loop_header
    %s821 = sphi %s817, %s823
    %p822 = scmp.ge.s32.totalorder %s821, %s819
  $region59: #{sat_cnf_evaluator.1} parent=0 // loop_header_branch
    %825 = sbr.rel (%p822) target = $region63
  $region60: #{sat_cnf_evaluator.1} parent=0 // loop_body
    %s826 = smul.u32 %s821, 128
    %v827 = vstv %s826
    %v828 = vadd.s32 %v827, %v78
    %829 = vset.pattern.permute.xlu0 4
    %830 = vperm.xlu0 %829, %v800
    %v831 = vpop.permute.xlu0 %830
    %832 = vset.pattern.permute.xlu0 4
    %833 = vperm.xlu0 %832, %v801
    %v834 = vpop.permute.xlu0 %833
    %835 = vset.pattern.permute.xlu0 4
    %836 = vperm.xlu0 %835, %v802
    %v837 = vpop.permute.xlu0 %836
    %838 = vset.pattern.permute.xlu0 4
    %839 = vperm.xlu0 %838, %v803
    %v840 = vpop.permute.xlu0 %839
    %841 = vset.pattern.permute.xlu0 4
    %842 = vperm.xlu0 %841, %v804
    %v843 = vpop.permute.xlu0 %842
    %844 = vset.pattern.permute.xlu0 4
    %845 = vperm.xlu0 %844, %v805
    %v846 = vpop.permute.xlu0 %845
    %847 = vset.pattern.permute.xlu0 4
    %848 = vperm.xlu0 %847, %v806
    %v849 = vpop.permute.xlu0 %848
    %850 = vset.pattern.permute.xlu0 4
    %851 = vperm.xlu0 %850, %v807
    %v852 = vpop.permute.xlu0 %851
    %853 = vset.pattern.permute.xlu0 4
    %854 = vperm.xlu0 %853, %v808
    %v855 = vpop.permute.xlu0 %854
    %856 = vset.pattern.permute.xlu0 4
    %857 = vperm.xlu0 %856, %v809
    %v858 = vpop.permute.xlu0 %857
    %859 = vset.pattern.permute.xlu0 4
    %860 = vperm.xlu0 %859, %v810
    %v861 = vpop.permute.xlu0 %860
    %862 = vset.pattern.permute.xlu0 4
    %863 = vperm.xlu0 %862, %v811
    %v864 = vpop.permute.xlu0 %863
    %865 = vset.pattern.permute.xlu0 4
    %866 = vperm.xlu0 %865, %v812
    %v867 = vpop.permute.xlu0 %866
    %868 = vset.pattern.permute.xlu0 4
    %869 = vperm.xlu0 %868, %v813
    %v870 = vpop.permute.xlu0 %869
    %871 = vset.pattern.permute.xlu0 4
    %872 = vperm.xlu0 %871, %v814
    %v873 = vpop.permute.xlu0 %872
    %874 = vset.pattern.permute.xlu0 4
    %875 = vperm.xlu0 %874, %v815
    %v876 = vpop.permute.xlu0 %875
    %vm877 = vcmp.eq.s32.totalorder %v831, %v828
    %vm878 = vcmp.eq.s32.totalorder %v834, %v828
    %vm879 = vcmp.eq.s32.totalorder %v837, %v828
    %vm880 = vcmp.eq.s32.totalorder %v840, %v828
    %vm881 = vcmp.eq.s32.totalorder %v843, %v828
    %vm882 = vcmp.eq.s32.totalorder %v846, %v828
    %vm883 = vcmp.eq.s32.totalorder %v849, %v828
    %vm884 = vcmp.eq.s32.totalorder %v852, %v828
    %vm885 = vcmp.eq.s32.totalorder %v855, %v828
    %vm886 = vcmp.eq.s32.totalorder %v858, %v828
    %vm887 = vcmp.eq.s32.totalorder %v861, %v828
    %vm888 = vcmp.eq.s32.totalorder %v864, %v828
    %vm889 = vcmp.eq.s32.totalorder %v867, %v828
    %vm890 = vcmp.eq.s32.totalorder %v870, %v828
    %vm891 = vcmp.eq.s32.totalorder %v873, %v828
    %vm892 = vcmp.eq.s32.totalorder %v876, %v828
    %v893 = vsel %vm877, 1, 0
    %v894 = vsel %vm878, 1, 0
    %v895 = vsel %vm879, 1, 0
    %v896 = vsel %vm880, 1, 0
    %v897 = vsel %vm881, 1, 0
    %v898 = vsel %vm882, 1, 0
    %v899 = vsel %vm883, 1, 0
    %v900 = vsel %vm884, 1, 0
    %v901 = vsel %vm885, 1, 0
    %v902 = vsel %vm886, 1, 0
    %v903 = vsel %vm887, 1, 0
    %v904 = vsel %vm888, 1, 0
    %v905 = vsel %vm889, 1, 0
    %v906 = vsel %vm890, 1, 0
    %v907 = vsel %vm891, 1, 0
    %v908 = vsel %vm892, 1, 0
    %v909 = vcvt.s32.f32 %v893
    %v910 = vcvt.s32.f32 %v894
    %v911 = vcvt.s32.f32 %v895
    %v912 = vcvt.s32.f32 %v896
    %v913 = vcvt.s32.f32 %v897
    %v914 = vcvt.s32.f32 %v898
    %v915 = vcvt.s32.f32 %v899
    %v916 = vcvt.s32.f32 %v900
    %v917 = vcvt.s32.f32 %v901
    %v918 = vcvt.s32.f32 %v902
    %v919 = vcvt.s32.f32 %v903
    %v920 = vcvt.s32.f32 %v904
    %v921 = vcvt.s32.f32 %v905
    %v922 = vcvt.s32.f32 %v906
    %v923 = vcvt.s32.f32 %v907
    %v924 = vcvt.s32.f32 %v908
    %v925 = vpack.c.bf16 %v910, %v909
    %v926 = vpack.c.bf16 %v912, %v911
    %v927 = vpack.c.bf16 %v914, %v913
    %v928 = vpack.c.bf16 %v916, %v915
    %v929 = vpack.c.bf16 %v918, %v917
    %v930 = vpack.c.bf16 %v920, %v919
    %v931 = vpack.c.bf16 %v922, %v921
    %v932 = vpack.c.bf16 %v924, %v923
    %v934 = vrot.slane %v95, 2
    %936 = vmatprep.subr.bf16.mxu0 0
    %937 = vmatpush1.bf16.msra.mxu0 %v925
    %938 = vmatprep.subr.bf16.mxu0 0
    %939 = vmatpush1.bf16.msra.mxu0 %v926
    %940 = vmatprep.subr.bf16.mxu0 0
    %941 = vmatpush1.bf16.msra.mxu0 %v927
    %942 = vmatprep.subr.bf16.mxu0 0
    %943 = vmatpush1.bf16.msra.mxu0 %v928
    %944 = vmatprep.subr.bf16.mxu0 0
    %945 = vmatpush1.bf16.msra.mxu0 %v929
    %946 = vmatprep.subr.bf16.mxu0 0
    %947 = vmatpush1.bf16.msra.mxu0 %v930
    %948 = vmatprep.subr.bf16.mxu0 0
    %949 = vmatpush1.bf16.msra.mxu0 %v931
    %950 = vmatprep.subr.bf16.mxu0 0
    %951 = vmatpush1.bf16.msra.mxu0 %v932
    %952 = vmatprep.subr.bf16.mxu0 0
    %953 = vmatpush1.bf16.msra.mxu0 0
    %954 = vmatprep.subr.bf16.mxu0 0
    %955 = vmatpush1.bf16.msra.mxu0 0
    %956 = vmatprep.subr.bf16.mxu0 0
    %957 = vmatpush1.bf16.msra.mxu0 0
    %958 = vmatprep.subr.bf16.mxu0 0
    %959 = vmatpush1.bf16.msra.mxu0 0
    %960 = vmatprep.subr.bf16.mxu0 0
    %961 = vmatpush1.bf16.msra.mxu0 0
    %962 = vmatprep.subr.bf16.mxu0 0
    %963 = vmatpush1.bf16.msra.mxu0 0
    %964 = vmatprep.subr.bf16.mxu0 0
    %965 = vmatpush1.bf16.msra.mxu0 0
    %966 = vmatprep.subr.bf16.mxu0 0
    %967 = vmatpush1.bf16.msra.mxu0 0
    %968 = vmatprep.mubr.bf16.mxu0 0
    %969 = vmatmul.mubr.bf16.gmra.mrb[0].mxu0 %v934
    %v970 = vpop.f32.mrb[0].mxu0
    %v971 = vadd.f32 0.0, %v970
    %v972 = vpop.f32.mrb[0].mxu0
    %v973 = vpop.f32.mrb[0].mxu0
    %v974 = vpop.f32.mrb[0].mxu0
    %975 = vdwg.mxu0
    %s976 = scalar_lea.vmem [#allocation2], %s821
    %v977 = vld [vmem:[%s976] sm:$0x1]
    %v978 = vadd.f32 %v977, %v971
    %979 = vst [vmem:[%s976] sm:$0x1] %v978
  $region61: #{sat_cnf_evaluator.1} parent=0 // loop_footer
    %s823 = sadd.s32 %s821, 1
  $region62: #{sat_cnf_evaluator.1} parent=0 // loop_footer_branch
    %820 = sbr.rel target = $region58
  $region63: #{sat_cnf_evaluator.1} parent=0 // loop_exit
    _
  %v980 = vld [vmem:[%s7] sm:$0xff]
  %v981 = vld [vmem:[%s7 + $0x8] sm:$0xff]
  %v982 = vld [vmem:[%s7 + $0x10] sm:$0xff]
  %v983 = vld [vmem:[%s7 + $0x18] sm:$0xff]
  %v984 = vld [vmem:[%s7 + $0x20] sm:$0xff]
  %v985 = vld [vmem:[%s7 + $0x28] sm:$0xff]
  %v986 = vld [vmem:[%s7 + $0x30] sm:$0xff]
  %v987 = vld [vmem:[%s7 + $0x38] sm:$0xff]
  %v988 = vld [vmem:[%s7 + $0x40] sm:$0xff]
  %v989 = vld [vmem:[%s7 + $0x48] sm:$0xff]
  %v990 = vld [vmem:[%s7 + $0x50] sm:$0xff]
  %v991 = vld [vmem:[%s7 + $0x58] sm:$0xff]
  %v992 = vld [vmem:[%s7 + $0x60] sm:$0xff]
  %v993 = vld [vmem:[%s7 + $0x68] sm:$0xff]
  %v994 = vld [vmem:[%s7 + $0x70] sm:$0xff]
  %v995 = vld [vmem:[%s7 + $0x78] sm:$0xff]
  %s996 = sadd.s32 %s96, 5
  %s997 = sld [smem:[#allocation6 + %s996]]
  %s998 = sld [smem:[#allocation7 + %s996]]
  %s999 = sadd.s32 %s998, 1
  // While loop
  $region64: #{sat_cnf_evaluator.1} parent=0 // loop_pre_header
    _
  $region65: #{sat_cnf_evaluator.1} parent=0 // loop_header
    %s1001 = sphi %s997, %s1003
    %p1002 = scmp.ge.s32.totalorder %s1001, %s999
  $region66: #{sat_cnf_evaluator.1} parent=0 // loop_header_branch
    %1005 = sbr.rel (%p1002) target = $region70
  $region67: #{sat_cnf_evaluator.1} parent=0 // loop_body
    %s1006 = smul.u32 %s1001, 128
    %v1007 = vstv %s1006
    %v1008 = vadd.s32 %v1007, %v78
    %1009 = vset.pattern.permute.xlu0 5
    %1010 = vperm.xlu0 %1009, %v980
    %v1011 = vpop.permute.xlu0 %1010
    %1012 = vset.pattern.permute.xlu0 5
    %1013 = vperm.xlu0 %1012, %v981
    %v1014 = vpop.permute.xlu0 %1013
    %1015 = vset.pattern.permute.xlu0 5
    %1016 = vperm.xlu0 %1015, %v982
    %v1017 = vpop.permute.xlu0 %1016
    %1018 = vset.pattern.permute.xlu0 5
    %1019 = vperm.xlu0 %1018, %v983
    %v1020 = vpop.permute.xlu0 %1019
    %1021 = vset.pattern.permute.xlu0 5
    %1022 = vperm.xlu0 %1021, %v984
    %v1023 = vpop.permute.xlu0 %1022
    %1024 = vset.pattern.permute.xlu0 5
    %1025 = vperm.xlu0 %1024, %v985
    %v1026 = vpop.permute.xlu0 %1025
    %1027 = vset.pattern.permute.xlu0 5
    %1028 = vperm.xlu0 %1027, %v986
    %v1029 = vpop.permute.xlu0 %1028
    %1030 = vset.pattern.permute.xlu0 5
    %1031 = vperm.xlu0 %1030, %v987
    %v1032 = vpop.permute.xlu0 %1031
    %1033 = vset.pattern.permute.xlu0 5
    %1034 = vperm.xlu0 %1033, %v988
    %v1035 = vpop.permute.xlu0 %1034
    %1036 = vset.pattern.permute.xlu0 5
    %1037 = vperm.xlu0 %1036, %v989
    %v1038 = vpop.permute.xlu0 %1037
    %1039 = vset.pattern.permute.xlu0 5
    %1040 = vperm.xlu0 %1039, %v990
    %v1041 = vpop.permute.xlu0 %1040
    %1042 = vset.pattern.permute.xlu0 5
    %1043 = vperm.xlu0 %1042, %v991
    %v1044 = vpop.permute.xlu0 %1043
    %1045 = vset.pattern.permute.xlu0 5
    %1046 = vperm.xlu0 %1045, %v992
    %v1047 = vpop.permute.xlu0 %1046
    %1048 = vset.pattern.permute.xlu0 5
    %1049 = vperm.xlu0 %1048, %v993
    %v1050 = vpop.permute.xlu0 %1049
    %1051 = vset.pattern.permute.xlu0 5
    %1052 = vperm.xlu0 %1051, %v994
    %v1053 = vpop.permute.xlu0 %1052
    %1054 = vset.pattern.permute.xlu0 5
    %1055 = vperm.xlu0 %1054, %v995
    %v1056 = vpop.permute.xlu0 %1055
    %vm1057 = vcmp.eq.s32.totalorder %v1011, %v1008
    %vm1058 = vcmp.eq.s32.totalorder %v1014, %v1008
    %vm1059 = vcmp.eq.s32.totalorder %v1017, %v1008
    %vm1060 = vcmp.eq.s32.totalorder %v1020, %v1008
    %vm1061 = vcmp.eq.s32.totalorder %v1023, %v1008
    %vm1062 = vcmp.eq.s32.totalorder %v1026, %v1008
    %vm1063 = vcmp.eq.s32.totalorder %v1029, %v1008
    %vm1064 = vcmp.eq.s32.totalorder %v1032, %v1008
    %vm1065 = vcmp.eq.s32.totalorder %v1035, %v1008
    %vm1066 = vcmp.eq.s32.totalorder %v1038, %v1008
    %vm1067 = vcmp.eq.s32.totalorder %v1041, %v1008
    %vm1068 = vcmp.eq.s32.totalorder %v1044, %v1008
    %vm1069 = vcmp.eq.s32.totalorder %v1047, %v1008
    %vm1070 = vcmp.eq.s32.totalorder %v1050, %v1008
    %vm1071 = vcmp.eq.s32.totalorder %v1053, %v1008
    %vm1072 = vcmp.eq.s32.totalorder %v1056, %v1008
    %v1073 = vsel %vm1057, 1, 0
    %v1074 = vsel %vm1058, 1, 0
    %v1075 = vsel %vm1059, 1, 0
    %v1076 = vsel %vm1060, 1, 0
    %v1077 = vsel %vm1061, 1, 0
    %v1078 = vsel %vm1062, 1, 0
    %v1079 = vsel %vm1063, 1, 0
    %v1080 = vsel %vm1064, 1, 0
    %v1081 = vsel %vm1065, 1, 0
    %v1082 = vsel %vm1066, 1, 0
    %v1083 = vsel %vm1067, 1, 0
    %v1084 = vsel %vm1068, 1, 0
    %v1085 = vsel %vm1069, 1, 0
    %v1086 = vsel %vm1070, 1, 0
    %v1087 = vsel %vm1071, 1, 0
    %v1088 = vsel %vm1072, 1, 0
    %v1089 = vcvt.s32.f32 %v1073
    %v1090 = vcvt.s32.f32 %v1074
    %v1091 = vcvt.s32.f32 %v1075
    %v1092 = vcvt.s32.f32 %v1076
    %v1093 = vcvt.s32.f32 %v1077
    %v1094 = vcvt.s32.f32 %v1078
    %v1095 = vcvt.s32.f32 %v1079
    %v1096 = vcvt.s32.f32 %v1080
    %v1097 = vcvt.s32.f32 %v1081
    %v1098 = vcvt.s32.f32 %v1082
    %v1099 = vcvt.s32.f32 %v1083
    %v1100 = vcvt.s32.f32 %v1084
    %v1101 = vcvt.s32.f32 %v1085
    %v1102 = vcvt.s32.f32 %v1086
    %v1103 = vcvt.s32.f32 %v1087
    %v1104 = vcvt.s32.f32 %v1088
    %v1105 = vpack.c.bf16 %v1090, %v1089
    %v1106 = vpack.c.bf16 %v1092, %v1091
    %v1107 = vpack.c.bf16 %v1094, %v1093
    %v1108 = vpack.c.bf16 %v1096, %v1095
    %v1109 = vpack.c.bf16 %v1098, %v1097
    %v1110 = vpack.c.bf16 %v1100, %v1099
    %v1111 = vpack.c.bf16 %v1102, %v1101
    %v1112 = vpack.c.bf16 %v1104, %v1103
    %v1114 = vshrl.u32 %v95, 16
    %v1116 = vrot.slane %v1114, 2
    %1118 = vmatprep.subr.bf16.mxu0 0
    %1119 = vmatpush1.bf16.msra.mxu0 %v1105
    %1120 = vmatprep.subr.bf16.mxu0 0
    %1121 = vmatpush1.bf16.msra.mxu0 %v1106
    %1122 = vmatprep.subr.bf16.mxu0 0
    %1123 = vmatpush1.bf16.msra.mxu0 %v1107
    %1124 = vmatprep.subr.bf16.mxu0 0
    %1125 = vmatpush1.bf16.msra.mxu0 %v1108
    %1126 = vmatprep.subr.bf16.mxu0 0
    %1127 = vmatpush1.bf16.msra.mxu0 %v1109
    %1128 = vmatprep.subr.bf16.mxu0 0
    %1129 = vmatpush1.bf16.msra.mxu0 %v1110
    %1130 = vmatprep.subr.bf16.mxu0 0
    %1131 = vmatpush1.bf16.msra.mxu0 %v1111
    %1132 = vmatprep.subr.bf16.mxu0 0
    %1133 = vmatpush1.bf16.msra.mxu0 %v1112
    %1134 = vmatprep.subr.bf16.mxu0 0
    %1135 = vmatpush1.bf16.msra.mxu0 0
    %1136 = vmatprep.subr.bf16.mxu0 0
    %1137 = vmatpush1.bf16.msra.mxu0 0
    %1138 = vmatprep.subr.bf16.mxu0 0
    %1139 = vmatpush1.bf16.msra.mxu0 0
    %1140 = vmatprep.subr.bf16.mxu0 0
    %1141 = vmatpush1.bf16.msra.mxu0 0
    %1142 = vmatprep.subr.bf16.mxu0 0
    %1143 = vmatpush1.bf16.msra.mxu0 0
    %1144 = vmatprep.subr.bf16.mxu0 0
    %1145 = vmatpush1.bf16.msra.mxu0 0
    %1146 = vmatprep.subr.bf16.mxu0 0
    %1147 = vmatpush1.bf16.msra.mxu0 0
    %1148 = vmatprep.subr.bf16.mxu0 0
    %1149 = vmatpush1.bf16.msra.mxu0 0
    %1150 = vmatprep.mubr.bf16.mxu0 0
    %1151 = vmatmul.mubr.bf16.gmra.mrb[0].mxu0 %v1116
    %v1152 = vpop.f32.mrb[0].mxu0
    %v1153 = vadd.f32 0.0, %v1152
    %v1154 = vpop.f32.mrb[0].mxu0
    %v1155 = vpop.f32.mrb[0].mxu0
    %v1156 = vpop.f32.mrb[0].mxu0
    %1157 = vdwg.mxu0
    %s1158 = scalar_lea.vmem [#allocation2], %s1001
    %v1159 = vld [vmem:[%s1158] sm:$0x1]
    %v1160 = vadd.f32 %v1159, %v1153
    %1161 = vst [vmem:[%s1158] sm:$0x1] %v1160
  $region68: #{sat_cnf_evaluator.1} parent=0 // loop_footer
    %s1003 = sadd.s32 %s1001, 1
  $region69: #{sat_cnf_evaluator.1} parent=0 // loop_footer_branch
    %1000 = sbr.rel target = $region65
  $region70: #{sat_cnf_evaluator.1} parent=0 // loop_exit
    _
  %v1162 = vld [vmem:[%s7] sm:$0xff]
  %v1163 = vld [vmem:[%s7 + $0x8] sm:$0xff]
  %v1164 = vld [vmem:[%s7 + $0x10] sm:$0xff]
  %v1165 = vld [vmem:[%s7 + $0x18] sm:$0xff]
  %v1166 = vld [vmem:[%s7 + $0x20] sm:$0xff]
  %v1167 = vld [vmem:[%s7 + $0x28] sm:$0xff]
  %v1168 = vld [vmem:[%s7 + $0x30] sm:$0xff]
  %v1169 = vld [vmem:[%s7 + $0x38] sm:$0xff]
  %v1170 = vld [vmem:[%s7 + $0x40] sm:$0xff]
  %v1171 = vld [vmem:[%s7 + $0x48] sm:$0xff]
  %v1172 = vld [vmem:[%s7 + $0x50] sm:$0xff]
  %v1173 = vld [vmem:[%s7 + $0x58] sm:$0xff]
  %v1174 = vld [vmem:[%s7 + $0x60] sm:$0xff]
  %v1175 = vld [vmem:[%s7 + $0x68] sm:$0xff]
  %v1176 = vld [vmem:[%s7 + $0x70] sm:$0xff]
  %v1177 = vld [vmem:[%s7 + $0x78] sm:$0xff]
  %s1178 = sadd.s32 %s96, 6
  %s1179 = sld [smem:[#allocation6 + %s1178]]
  %s1180 = sld [smem:[#allocation7 + %s1178]]
  %s1181 = sadd.s32 %s1180, 1
  // While loop
  $region71: #{sat_cnf_evaluator.1} parent=0 // loop_pre_header
    _
  $region72: #{sat_cnf_evaluator.1} parent=0 // loop_header
    %s1183 = sphi %s1179, %s1185
    %p1184 = scmp.ge.s32.totalorder %s1183, %s1181
  $region73: #{sat_cnf_evaluator.1} parent=0 // loop_header_branch
    %1187 = sbr.rel (%p1184) target = $region77
  $region74: #{sat_cnf_evaluator.1} parent=0 // loop_body
    %s1188 = smul.u32 %s1183, 128
    %v1189 = vstv %s1188
    %v1190 = vadd.s32 %v1189, %v78
    %1191 = vset.pattern.permute.xlu0 6
    %1192 = vperm.xlu0 %1191, %v1162
    %v1193 = vpop.permute.xlu0 %1192
    %1194 = vset.pattern.permute.xlu0 6
    %1195 = vperm.xlu0 %1194, %v1163
    %v1196 = vpop.permute.xlu0 %1195
    %1197 = vset.pattern.permute.xlu0 6
    %1198 = vperm.xlu0 %1197, %v1164
    %v1199 = vpop.permute.xlu0 %1198
    %1200 = vset.pattern.permute.xlu0 6
    %1201 = vperm.xlu0 %1200, %v1165
    %v1202 = vpop.permute.xlu0 %1201
    %1203 = vset.pattern.permute.xlu0 6
    %1204 = vperm.xlu0 %1203, %v1166
    %v1205 = vpop.permute.xlu0 %1204
    %1206 = vset.pattern.permute.xlu0 6
    %1207 = vperm.xlu0 %1206, %v1167
    %v1208 = vpop.permute.xlu0 %1207
    %1209 = vset.pattern.permute.xlu0 6
    %1210 = vperm.xlu0 %1209, %v1168
    %v1211 = vpop.permute.xlu0 %1210
    %1212 = vset.pattern.permute.xlu0 6
    %1213 = vperm.xlu0 %1212, %v1169
    %v1214 = vpop.permute.xlu0 %1213
    %1215 = vset.pattern.permute.xlu0 6
    %1216 = vperm.xlu0 %1215, %v1170
    %v1217 = vpop.permute.xlu0 %1216
    %1218 = vset.pattern.permute.xlu0 6
    %1219 = vperm.xlu0 %1218, %v1171
    %v1220 = vpop.permute.xlu0 %1219
    %1221 = vset.pattern.permute.xlu0 6
    %1222 = vperm.xlu0 %1221, %v1172
    %v1223 = vpop.permute.xlu0 %1222
    %1224 = vset.pattern.permute.xlu0 6
    %1225 = vperm.xlu0 %1224, %v1173
    %v1226 = vpop.permute.xlu0 %1225
    %1227 = vset.pattern.permute.xlu0 6
    %1228 = vperm.xlu0 %1227, %v1174
    %v1229 = vpop.permute.xlu0 %1228
    %1230 = vset.pattern.permute.xlu0 6
    %1231 = vperm.xlu0 %1230, %v1175
    %v1232 = vpop.permute.xlu0 %1231
    %1233 = vset.pattern.permute.xlu0 6
    %1234 = vperm.xlu0 %1233, %v1176
    %v1235 = vpop.permute.xlu0 %1234
    %1236 = vset.pattern.permute.xlu0 6
    %1237 = vperm.xlu0 %1236, %v1177
    %v1238 = vpop.permute.xlu0 %1237
    %vm1239 = vcmp.eq.s32.totalorder %v1193, %v1190
    %vm1240 = vcmp.eq.s32.totalorder %v1196, %v1190
    %vm1241 = vcmp.eq.s32.totalorder %v1199, %v1190
    %vm1242 = vcmp.eq.s32.totalorder %v1202, %v1190
    %vm1243 = vcmp.eq.s32.totalorder %v1205, %v1190
    %vm1244 = vcmp.eq.s32.totalorder %v1208, %v1190
    %vm1245 = vcmp.eq.s32.totalorder %v1211, %v1190
    %vm1246 = vcmp.eq.s32.totalorder %v1214, %v1190
    %vm1247 = vcmp.eq.s32.totalorder %v1217, %v1190
    %vm1248 = vcmp.eq.s32.totalorder %v1220, %v1190
    %vm1249 = vcmp.eq.s32.totalorder %v1223, %v1190
    %vm1250 = vcmp.eq.s32.totalorder %v1226, %v1190
    %vm1251 = vcmp.eq.s32.totalorder %v1229, %v1190
    %vm1252 = vcmp.eq.s32.totalorder %v1232, %v1190
    %vm1253 = vcmp.eq.s32.totalorder %v1235, %v1190
    %vm1254 = vcmp.eq.s32.totalorder %v1238, %v1190
    %v1255 = vsel %vm1239, 1, 0
    %v1256 = vsel %vm1240, 1, 0
    %v1257 = vsel %vm1241, 1, 0
    %v1258 = vsel %vm1242, 1, 0
    %v1259 = vsel %vm1243, 1, 0
    %v1260 = vsel %vm1244, 1, 0
    %v1261 = vsel %vm1245, 1, 0
    %v1262 = vsel %vm1246, 1, 0
    %v1263 = vsel %vm1247, 1, 0
    %v1264 = vsel %vm1248, 1, 0
    %v1265 = vsel %vm1249, 1, 0
    %v1266 = vsel %vm1250, 1, 0
    %v1267 = vsel %vm1251, 1, 0
    %v1268 = vsel %vm1252, 1, 0
    %v1269 = vsel %vm1253, 1, 0
    %v1270 = vsel %vm1254, 1, 0
    %v1271 = vcvt.s32.f32 %v1255
    %v1272 = vcvt.s32.f32 %v1256
    %v1273 = vcvt.s32.f32 %v1257
    %v1274 = vcvt.s32.f32 %v1258
    %v1275 = vcvt.s32.f32 %v1259
    %v1276 = vcvt.s32.f32 %v1260
    %v1277 = vcvt.s32.f32 %v1261
    %v1278 = vcvt.s32.f32 %v1262
    %v1279 = vcvt.s32.f32 %v1263
    %v1280 = vcvt.s32.f32 %v1264
    %v1281 = vcvt.s32.f32 %v1265
    %v1282 = vcvt.s32.f32 %v1266
    %v1283 = vcvt.s32.f32 %v1267
    %v1284 = vcvt.s32.f32 %v1268
    %v1285 = vcvt.s32.f32 %v1269
    %v1286 = vcvt.s32.f32 %v1270
    %v1287 = vpack.c.bf16 %v1272, %v1271
    %v1288 = vpack.c.bf16 %v1274, %v1273
    %v1289 = vpack.c.bf16 %v1276, %v1275
    %v1290 = vpack.c.bf16 %v1278, %v1277
    %v1291 = vpack.c.bf16 %v1280, %v1279
    %v1292 = vpack.c.bf16 %v1282, %v1281
    %v1293 = vpack.c.bf16 %v1284, %v1283
    %v1294 = vpack.c.bf16 %v1286, %v1285
    %v1296 = vrot.slane %v95, 3
    %1298 = vmatprep.subr.bf16.mxu0 0
    %1299 = vmatpush1.bf16.msra.mxu0 %v1287
    %1300 = vmatprep.subr.bf16.mxu0 0
    %1301 = vmatpush1.bf16.msra.mxu0 %v1288
    %1302 = vmatprep.subr.bf16.mxu0 0
    %1303 = vmatpush1.bf16.msra.mxu0 %v1289
    %1304 = vmatprep.subr.bf16.mxu0 0
    %1305 = vmatpush1.bf16.msra.mxu0 %v1290
    %1306 = vmatprep.subr.bf16.mxu0 0
    %1307 = vmatpush1.bf16.msra.mxu0 %v1291
    %1308 = vmatprep.subr.bf16.mxu0 0
    %1309 = vmatpush1.bf16.msra.mxu0 %v1292
    %1310 = vmatprep.subr.bf16.mxu0 0
    %1311 = vmatpush1.bf16.msra.mxu0 %v1293
    %1312 = vmatprep.subr.bf16.mxu0 0
    %1313 = vmatpush1.bf16.msra.mxu0 %v1294
    %1314 = vmatprep.subr.bf16.mxu0 0
    %1315 = vmatpush1.bf16.msra.mxu0 0
    %1316 = vmatprep.subr.bf16.mxu0 0
    %1317 = vmatpush1.bf16.msra.mxu0 0
    %1318 = vmatprep.subr.bf16.mxu0 0
    %1319 = vmatpush1.bf16.msra.mxu0 0
    %1320 = vmatprep.subr.bf16.mxu0 0
    %1321 = vmatpush1.bf16.msra.mxu0 0
    %1322 = vmatprep.subr.bf16.mxu0 0
    %1323 = vmatpush1.bf16.msra.mxu0 0
    %1324 = vmatprep.subr.bf16.mxu0 0
    %1325 = vmatpush1.bf16.msra.mxu0 0
    %1326 = vmatprep.subr.bf16.mxu0 0
    %1327 = vmatpush1.bf16.msra.mxu0 0
    %1328 = vmatprep.subr.bf16.mxu0 0
    %1329 = vmatpush1.bf16.msra.mxu0 0
    %1330 = vmatprep.mubr.bf16.mxu0 0
    %1331 = vmatmul.mubr.bf16.gmra.mrb[0].mxu0 %v1296
    %v1332 = vpop.f32.mrb[0].mxu0
    %v1333 = vadd.f32 0.0, %v1332
    %v1334 = vpop.f32.mrb[0].mxu0
    %v1335 = vpop.f32.mrb[0].mxu0
    %v1336 = vpop.f32.mrb[0].mxu0
    %1337 = vdwg.mxu0
    %s1338 = scalar_lea.vmem [#allocation2], %s1183
    %v1339 = vld [vmem:[%s1338] sm:$0x1]
    %v1340 = vadd.f32 %v1339, %v1333
    %1341 = vst [vmem:[%s1338] sm:$0x1] %v1340
  $region75: #{sat_cnf_evaluator.1} parent=0 // loop_footer
    %s1185 = sadd.s32 %s1183, 1
  $region76: #{sat_cnf_evaluator.1} parent=0 // loop_footer_branch
    %1182 = sbr.rel target = $region72
  $region77: #{sat_cnf_evaluator.1} parent=0 // loop_exit
    _
  %v1342 = vld [vmem:[%s7] sm:$0xff]
  %v1343 = vld [vmem:[%s7 + $0x8] sm:$0xff]
  %v1344 = vld [vmem:[%s7 + $0x10] sm:$0xff]
  %v1345 = vld [vmem:[%s7 + $0x18] sm:$0xff]
  %v1346 = vld [vmem:[%s7 + $0x20] sm:$0xff]
  %v1347 = vld [vmem:[%s7 + $0x28] sm:$0xff]
  %v1348 = vld [vmem:[%s7 + $0x30] sm:$0xff]
  %v1349 = vld [vmem:[%s7 + $0x38] sm:$0xff]
  %v1350 = vld [vmem:[%s7 + $0x40] sm:$0xff]
  %v1351 = vld [vmem:[%s7 + $0x48] sm:$0xff]
  %v1352 = vld [vmem:[%s7 + $0x50] sm:$0xff]
  %v1353 = vld [vmem:[%s7 + $0x58] sm:$0xff]
  %v1354 = vld [vmem:[%s7 + $0x60] sm:$0xff]
  %v1355 = vld [vmem:[%s7 + $0x68] sm:$0xff]
  %v1356 = vld [vmem:[%s7 + $0x70] sm:$0xff]
  %v1357 = vld [vmem:[%s7 + $0x78] sm:$0xff]
  %s1358 = sadd.s32 %s96, 7
  %s1359 = sld [smem:[#allocation6 + %s1358]]
  %s1360 = sld [smem:[#allocation7 + %s1358]]
  %s1361 = sadd.s32 %s1360, 1
  // While loop
  $region78: #{sat_cnf_evaluator.1} parent=0 // loop_pre_header
    _
  $region79: #{sat_cnf_evaluator.1} parent=0 // loop_header
    %s1363 = sphi %s1359, %s1365
    %p1364 = scmp.ge.s32.totalorder %s1363, %s1361
  $region80: #{sat_cnf_evaluator.1} parent=0 // loop_header_branch
    %1367 = sbr.rel (%p1364) target = $region84
  $region81: #{sat_cnf_evaluator.1} parent=0 // loop_body
    %s1368 = smul.u32 %s1363, 128
    %v1369 = vstv %s1368
    %v1370 = vadd.s32 %v1369, %v78
    %1371 = vset.pattern.permute.xlu0 7
    %1372 = vperm.xlu0 %1371, %v1342
    %v1373 = vpop.permute.xlu0 %1372
    %1374 = vset.pattern.permute.xlu0 7
    %1375 = vperm.xlu0 %1374, %v1343
    %v1376 = vpop.permute.xlu0 %1375
    %1377 = vset.pattern.permute.xlu0 7
    %1378 = vperm.xlu0 %1377, %v1344
    %v1379 = vpop.permute.xlu0 %1378
    %1380 = vset.pattern.permute.xlu0 7
    %1381 = vperm.xlu0 %1380, %v1345
    %v1382 = vpop.permute.xlu0 %1381
    %1383 = vset.pattern.permute.xlu0 7
    %1384 = vperm.xlu0 %1383, %v1346
    %v1385 = vpop.permute.xlu0 %1384
    %1386 = vset.pattern.permute.xlu0 7
    %1387 = vperm.xlu0 %1386, %v1347
    %v1388 = vpop.permute.xlu0 %1387
    %1389 = vset.pattern.permute.xlu0 7
    %1390 = vperm.xlu0 %1389, %v1348
    %v1391 = vpop.permute.xlu0 %1390
    %1392 = vset.pattern.permute.xlu0 7
    %1393 = vperm.xlu0 %1392, %v1349
    %v1394 = vpop.permute.xlu0 %1393
    %1395 = vset.pattern.permute.xlu0 7
    %1396 = vperm.xlu0 %1395, %v1350
    %v1397 = vpop.permute.xlu0 %1396
    %1398 = vset.pattern.permute.xlu0 7
    %1399 = vperm.xlu0 %1398, %v1351
    %v1400 = vpop.permute.xlu0 %1399
    %1401 = vset.pattern.permute.xlu0 7
    %1402 = vperm.xlu0 %1401, %v1352
    %v1403 = vpop.permute.xlu0 %1402
    %1404 = vset.pattern.permute.xlu0 7
    %1405 = vperm.xlu0 %1404, %v1353
    %v1406 = vpop.permute.xlu0 %1405
    %1407 = vset.pattern.permute.xlu0 7
    %1408 = vperm.xlu0 %1407, %v1354
    %v1409 = vpop.permute.xlu0 %1408
    %1410 = vset.pattern.permute.xlu0 7
    %1411 = vperm.xlu0 %1410, %v1355
    %v1412 = vpop.permute.xlu0 %1411
    %1413 = vset.pattern.permute.xlu0 7
    %1414 = vperm.xlu0 %1413, %v1356
    %v1415 = vpop.permute.xlu0 %1414
    %1416 = vset.pattern.permute.xlu0 7
    %1417 = vperm.xlu0 %1416, %v1357
    %v1418 = vpop.permute.xlu0 %1417
    %vm1419 = vcmp.eq.s32.totalorder %v1373, %v1370
    %vm1420 = vcmp.eq.s32.totalorder %v1376, %v1370
    %vm1421 = vcmp.eq.s32.totalorder %v1379, %v1370
    %vm1422 = vcmp.eq.s32.totalorder %v1382, %v1370
    %vm1423 = vcmp.eq.s32.totalorder %v1385, %v1370
    %vm1424 = vcmp.eq.s32.totalorder %v1388, %v1370
    %vm1425 = vcmp.eq.s32.totalorder %v1391, %v1370
    %vm1426 = vcmp.eq.s32.totalorder %v1394, %v1370
    %vm1427 = vcmp.eq.s32.totalorder %v1397, %v1370
    %vm1428 = vcmp.eq.s32.totalorder %v1400, %v1370
    %vm1429 = vcmp.eq.s32.totalorder %v1403, %v1370
    %vm1430 = vcmp.eq.s32.totalorder %v1406, %v1370
    %vm1431 = vcmp.eq.s32.totalorder %v1409, %v1370
    %vm1432 = vcmp.eq.s32.totalorder %v1412, %v1370
    %vm1433 = vcmp.eq.s32.totalorder %v1415, %v1370
    %vm1434 = vcmp.eq.s32.totalorder %v1418, %v1370
    %v1435 = vsel %vm1419, 1, 0
    %v1436 = vsel %vm1420, 1, 0
    %v1437 = vsel %vm1421, 1, 0
    %v1438 = vsel %vm1422, 1, 0
    %v1439 = vsel %vm1423, 1, 0
    %v1440 = vsel %vm1424, 1, 0
    %v1441 = vsel %vm1425, 1, 0
    %v1442 = vsel %vm1426, 1, 0
    %v1443 = vsel %vm1427, 1, 0
    %v1444 = vsel %vm1428, 1, 0
    %v1445 = vsel %vm1429, 1, 0
    %v1446 = vsel %vm1430, 1, 0
    %v1447 = vsel %vm1431, 1, 0
    %v1448 = vsel %vm1432, 1, 0
    %v1449 = vsel %vm1433, 1, 0
    %v1450 = vsel %vm1434, 1, 0
    %v1451 = vcvt.s32.f32 %v1435
    %v1452 = vcvt.s32.f32 %v1436
    %v1453 = vcvt.s32.f32 %v1437
    %v1454 = vcvt.s32.f32 %v1438
    %v1455 = vcvt.s32.f32 %v1439
    %v1456 = vcvt.s32.f32 %v1440
    %v1457 = vcvt.s32.f32 %v1441
    %v1458 = vcvt.s32.f32 %v1442
    %v1459 = vcvt.s32.f32 %v1443
    %v1460 = vcvt.s32.f32 %v1444
    %v1461 = vcvt.s32.f32 %v1445
    %v1462 = vcvt.s32.f32 %v1446
    %v1463 = vcvt.s32.f32 %v1447
    %v1464 = vcvt.s32.f32 %v1448
    %v1465 = vcvt.s32.f32 %v1449
    %v1466 = vcvt.s32.f32 %v1450
    %v1467 = vpack.c.bf16 %v1452, %v1451
    %v1468 = vpack.c.bf16 %v1454, %v1453
    %v1469 = vpack.c.bf16 %v1456, %v1455
    %v1470 = vpack.c.bf16 %v1458, %v1457
    %v1471 = vpack.c.bf16 %v1460, %v1459
    %v1472 = vpack.c.bf16 %v1462, %v1461
    %v1473 = vpack.c.bf16 %v1464, %v1463
    %v1474 = vpack.c.bf16 %v1466, %v1465
    %v1476 = vshrl.u32 %v95, 16
    %v1478 = vrot.slane %v1476, 3
    %1480 = vmatprep.subr.bf16.mxu0 0
    %1481 = vmatpush1.bf16.msra.mxu0 %v1467
    %1482 = vmatprep.subr.bf16.mxu0 0
    %1483 = vmatpush1.bf16.msra.mxu0 %v1468
    %1484 = vmatprep.subr.bf16.mxu0 0
    %1485 = vmatpush1.bf16.msra.mxu0 %v1469
    %1486 = vmatprep.subr.bf16.mxu0 0
    %1487 = vmatpush1.bf16.msra.mxu0 %v1470
    %1488 = vmatprep.subr.bf16.mxu0 0
    %1489 = vmatpush1.bf16.msra.mxu0 %v1471
    %1490 = vmatprep.subr.bf16.mxu0 0
    %1491 = vmatpush1.bf16.msra.mxu0 %v1472
    %1492 = vmatprep.subr.bf16.mxu0 0
    %1493 = vmatpush1.bf16.msra.mxu0 %v1473
    %1494 = vmatprep.subr.bf16.mxu0 0
    %1495 = vmatpush1.bf16.msra.mxu0 %v1474
    %1496 = vmatprep.subr.bf16.mxu0 0
    %1497 = vmatpush1.bf16.msra.mxu0 0
    %1498 = vmatprep.subr.bf16.mxu0 0
    %1499 = vmatpush1.bf16.msra.mxu0 0
    %1500 = vmatprep.subr.bf16.mxu0 0
    %1501 = vmatpush1.bf16.msra.mxu0 0
    %1502 = vmatprep.subr.bf16.mxu0 0
    %1503 = vmatpush1.bf16.msra.mxu0 0
    %1504 = vmatprep.subr.bf16.mxu0 0
    %1505 = vmatpush1.bf16.msra.mxu0 0
    %1506 = vmatprep.subr.bf16.mxu0 0
    %1507 = vmatpush1.bf16.msra.mxu0 0
    %1508 = vmatprep.subr.bf16.mxu0 0
    %1509 = vmatpush1.bf16.msra.mxu0 0
    %1510 = vmatprep.subr.bf16.mxu0 0
    %1511 = vmatpush1.bf16.msra.mxu0 0
    %1512 = vmatprep.mubr.bf16.mxu0 0
    %1513 = vmatmul.mubr.bf16.gmra.mrb[0].mxu0 %v1478
    %v1514 = vpop.f32.mrb[0].mxu0
    %v1515 = vadd.f32 0.0, %v1514
    %v1516 = vpop.f32.mrb[0].mxu0
    %v1517 = vpop.f32.mrb[0].mxu0
    %v1518 = vpop.f32.mrb[0].mxu0
    %1519 = vdwg.mxu0
    %s1520 = scalar_lea.vmem [#allocation2], %s1363
    %v1521 = vld [vmem:[%s1520] sm:$0x1]
    %v1522 = vadd.f32 %v1521, %v1515
    %1523 = vst [vmem:[%s1520] sm:$0x1] %v1522
  $region82: #{sat_cnf_evaluator.1} parent=0 // loop_footer
    %s1365 = sadd.s32 %s1363, 1
  $region83: #{sat_cnf_evaluator.1} parent=0 // loop_footer_branch
    %1362 = sbr.rel target = $region79
  $region84: #{sat_cnf_evaluator.1} parent=0 // loop_exit
    _
  // Predicated region
  $region85: #{sat_cnf_evaluator.1} parent=0 // pred_check
    %p1524 = pneg %p36
  $region86: #{sat_cnf_evaluator.1} parent=0 // pred_check_branch
    %1526 = sbr.rel (%p1524) target = $region88
  $region87: #{sat_cnf_evaluator.1} parent=0 // pred_region
    %v1527 = vld [vmem:[#allocation2] sm:$0x1]
    %vm1528 = vcmp.gt.f32.partialorder %v1527, 0.0
    %v1529 = vsel %vm1528, 1, 0
    %v1530 = vcvt.s32.f32 %v1529
    %1531 = vst [vmem:[%s9] sm:$0x1] %v1530
  $region88: #{sat_cnf_evaluator.1} parent=0 // pred_fallthru
    _
  // Predicated region
  $region89: #{sat_cnf_evaluator.1} parent=0 // pred_check
    _
  $region90: #{sat_cnf_evaluator.1} parent=0 // pred_check_branch
    %1533 = sbr.rel (0) target = $region92
  $region91: #{sat_cnf_evaluator.1} parent=0 // pred_region
    _
  $region92: #{sat_cnf_evaluator.1} parent=0 // pred_fallthru
    _
  // Predicated region
  $region93: #{sat_cnf_evaluator.1} parent=0 // pred_check
    _
  $region94: #{sat_cnf_evaluator.1} parent=0 // pred_check_branch
    %1535 = sbr.rel (0) target = $region96
  $region95: #{sat_cnf_evaluator.1} parent=0 // pred_region
    _
  $region96: #{sat_cnf_evaluator.1} parent=0 // pred_fallthru
    _
  // Predicated region
  $region97: #{sat_cnf_evaluator.1} parent=0 // pred_check
    _
  $region98: #{sat_cnf_evaluator.1} parent=0 // pred_check_branch
    %1537 = sbr.rel (0) target = $region100
  $region99: #{sat_cnf_evaluator.1} parent=0 // pred_region
    _
  $region100: #{sat_cnf_evaluator.1} parent=0 // pred_fallthru
    _
  // Predicated region
  $region101: #{sat_cnf_evaluator.1} parent=0 // pred_check
    _
  $region102: #{sat_cnf_evaluator.1} parent=0 // pred_check_branch
    %1539 = sbr.rel (0) target = $region104
  $region103: #{sat_cnf_evaluator.1} parent=0 // pred_region
    _
  $region104: #{sat_cnf_evaluator.1} parent=0 // pred_fallthru
    _

</llo_original>
